<compile_context>
chip_gen: v7x
topology: tpu7x:2x2x1
jax: 0.10.0
libtpu: 0.0.40
codegen_flags: <defaults>
</compile_context>

<pallas_src>
import math
import functools

import jax
import jax.numpy as jnp
from jax.experimental import pallas as pl
from jax.experimental.pallas import tpu as pltpu


# ----------------------------- in-kernel helpers -----------------------------

def _layernorm(x, gamma, beta, eps=1e-12):
    # LayerNorm over the last dim, biased variance (matches torch.nn.LayerNorm).
    mu = jnp.mean(x, axis=-1, keepdims=True)
    var = jnp.mean((x - mu) ** 2, axis=-1, keepdims=True)
    return (x - mu) * jax.lax.rsqrt(var + eps) * gamma + beta


def _gelu_tanh(x):
    # Matches FFN.gelu in the reference module (tanh approximation).
    return 0.5 * x * (1.0 + jnp.tanh(math.sqrt(2.0 / math.pi)
                                     * (x + 0.044715 * x ** 3)))


# --------------------------------- kernels -----------------------------------

def encoder_kernel(num_heads,
                   emb_ref, pe_ref, eg_ref, eb_ref, mask_ref,
                   wqkv_ref, bqkv_ref, wo_ref, bo_ref, g1_ref, be1_ref,
                   w1_ref, b1_ref, w2_ref, b2_ref, g2_ref, be2_ref,
                   o_ref, h_ref, ctx_ref):
    """Fused BERT encoder.

    grid = (layer, batch_tile).  The bf16 activation lives in a VMEM scratch
    (h_ref) across the layer axis; each grid step processes one batch tile
    (attention is independent per sequence so batch tiling is exact).
    """
    l = pl.program_id(0)
    bt = pl.program_id(1)
    TB, T, H = o_ref.shape
    NT = TB * T
    dh = H // num_heads
    row0 = pl.multiple_of(bt * TB, TB)

    # ---- layer 0: fused embeddings (word+type pre-summed) + pos + LN -> scratch
    @pl.when(l == 0)
    def _():
        e = emb_ref[...] + pe_ref[...][None, :, :]                # (TB,T,H)+(1,T,H)
        h_ref[pl.ds(row0, TB), :, :] = _layernorm(
            e, eg_ref[...], eb_ref[...]).astype(h_ref.dtype)

    x_bf = h_ref[pl.ds(row0, TB), :, :]                           # (TB,T,H) bf16
    x2 = x_bf.reshape(NT, H)                                      # (NT,H)  bf16

    def matmul(a_bf16, w_ref, b_ref):
        # bf16 MXU operands, f32 accumulation, f32 bias add.
        return (jnp.dot(a_bf16, w_ref[...],
                        preferred_element_type=jnp.float32) + b_ref[...])

    # ---- fused QKV projection: one (NT,H)@(H,3H) bf16 matmul ----
    # 1/sqrt(dh) is already folded into the q columns of wqkv/bqkv.
    qkv = matmul(x2, wqkv_ref, bqkv_ref)                          # (NT,3H) f32
    q = qkv[:, :H].reshape(TB, T, H).astype(jnp.bfloat16)
    k = qkv[:, H:2 * H].reshape(TB, T, H).astype(jnp.bfloat16)
    v = qkv[:, 2 * H:3 * H].reshape(TB, T, H).astype(jnp.bfloat16)

    mask_b = mask_ref[...]                                        # (TB,1,T) additive

    # ---- multi-head attention: static head loop, per-head contexts written
    #      directly into lane slices of a VMEM scratch (no concatenate) ----
    for h in range(num_heads):
        sl = slice(h * dh, (h + 1) * dh)
        s = jnp.einsum('btd,bsd->bts', q[:, :, sl], k[:, :, sl],
                       preferred_element_type=jnp.float32) + mask_b
        m = jnp.max(s, axis=-1, keepdims=True)
        e = jnp.exp(s - m)
        p = e * pl.reciprocal(jnp.sum(e, axis=-1, keepdims=True), approx=True)
        ctx_ref[:, :, sl] = jnp.einsum(
            'bts,bsd->btd', p.astype(jnp.bfloat16), v[:, :, sl],
            preferred_element_type=jnp.float32).astype(ctx_ref.dtype)

    ctx2 = ctx_ref[...].reshape(NT, H)                            # (NT,H) bf16

    # ---- attention output projection + residual + LayerNorm ----
    attn = matmul(ctx2, wo_ref, bo_ref)                           # (NT,H) f32
    h1 = _layernorm(attn + x2.astype(jnp.float32), g1_ref[...], be1_ref[...])
    h1_bf = h1.astype(jnp.bfloat16)

    # ---- FFN (dense -> gelu -> dense) + residual + LayerNorm ----
    ff = _gelu_tanh(matmul(h1_bf, w1_ref, b1_ref))                # (NT,I) f32
    ff = matmul(ff.astype(jnp.bfloat16), w2_ref, b2_ref)          # (NT,H) f32
    out = _layernorm(ff + h1, g2_ref[...], be2_ref[...])

    out_bf = out.astype(jnp.bfloat16).reshape(TB, T, H)
    h_ref[pl.ds(row0, TB), :, :] = out_bf      # resident for the next layer
    o_ref[...] = out_bf                        # bf16 per-layer output slab


def pooler_kernel(x_ref, w_ref, b_ref, o_ref):
    """tanh(first_token @ W + b), bf16 MXU operands, f32 accumulation."""
    o_ref[...] = jnp.tanh(jnp.dot(x_ref[...].astype(jnp.bfloat16), w_ref[...],
                                  preferred_element_type=jnp.float32)
                          + b_ref[...])


# --------------------------------- wrappers -----------------------------------

def _pick_block_batch(B, T, target_rows=256):
    """Largest divisor of B whose tile has ~target_rows rows (TB*T)."""
    tb = max(1, min(B, max(1, target_rows // max(T, 1))))
    while B % tb:
        tb -= 1
    return tb


def run_encoder(emb_sum, pos_emb, emb_g, emb_b, mask_add, params, num_heads,
                block_batch):
    L, H, H3 = params['wqkv'].shape
    I = params['w1'].shape[-1]
    B, T, _ = emb_sum.shape
    TB = block_batch
    assert B % TB == 0
    NB = B // TB

    const2 = lambda l, b: (0, 0)         # batch/layer-invariant: fetched once
    per_b = lambda l, b: (b, 0, 0)       # per-batch-tile activations/mask
    per_l = lambda l, b: (l, 0, 0)       # per-layer weights: resident across
                                         # batch tiles, prefetched across layers

    in_specs = [
        pl.BlockSpec((TB, T, H), per_b),     # word+type embedding sum
        pl.BlockSpec((T, H), const2),        # position embeddings (no B copies)
        pl.BlockSpec((1, H), const2),        # embedding LN gamma
        pl.BlockSpec((1, H), const2),        # embedding LN beta
        pl.BlockSpec((TB, 1, T), per_b),     # additive attention mask
        pl.BlockSpec((None, H, H3), per_l),  # wqkv (bf16, q-scale folded in)
        pl.BlockSpec((None, 1, H3), per_l),  # bqkv
        pl.BlockSpec((None, H, H), per_l),   # wo   (bf16)
        pl.BlockSpec((None, 1, H), per_l),   # bo
        pl.BlockSpec((None, 1, H), per_l),   # LN1 gamma
        pl.BlockSpec((None, 1, H), per_l),   # LN1 beta
        pl.BlockSpec((None, H, I), per_l),   # w1   (bf16)
        pl.BlockSpec((None, 1, I), per_l),   # b1
        pl.BlockSpec((None, I, H), per_l),   # w2   (bf16)
        pl.BlockSpec((None, 1, H), per_l),   # b2
        pl.BlockSpec((None, 1, H), per_l),   # LN2 gamma
        pl.BlockSpec((None, 1, H), per_l),   # LN2 beta
    ]

    return pl.pallas_call(
        functools.partial(encoder_kernel, num_heads),
        out_shape=jax.ShapeDtypeStruct((L, B, T, H), jnp.bfloat16),
        grid_spec=pltpu.PrefetchScalarGridSpec(
            num_scalar_prefetch=0,
            grid=(L, NB),
            in_specs=in_specs,
            out_specs=pl.BlockSpec((None, TB, T, H),
                                   lambda l, b: (l, b, 0, 0)),
            scratch_shapes=[
                pltpu.VMEM((B, T, H), jnp.bfloat16),    # layer-resident act.
                pltpu.VMEM((TB, T, H), jnp.bfloat16),   # per-tile head contexts
            ]),
        compiler_params=pltpu.CompilerParams(
            # layers are sequential (activation carry); batch tiles are
            # independent -> parallel (lets v7x split them over 2 TCs).
            dimension_semantics=("arbitrary", "parallel"),
            # Size per generation: <=~56 MiB on v7x, up to ~100 MiB on v5e/v6e.
            vmem_limit_bytes=64 * 1024 * 1024),
    )(emb_sum, pos_emb, emb_g, emb_b, mask_add,
      params['wqkv'], params['bqkv'], params['wo'], params['bo'],
      params['g1'], params['be1'], params['w1'], params['b1'],
      params['w2'], params['b2'], params['g2'], params['be2'])


def run_pooler(first_tok, w, b):
    vm = lambda: pl.BlockSpec(memory_space=pltpu.MemorySpace.VMEM)
    return pl.pallas_call(
        pooler_kernel,
        out_shape=jax.ShapeDtypeStruct((first_tok.shape[0], w.shape[1]),
                                       jnp.float32),
        in_specs=[vm(), vm(), vm()],
        out_specs=vm(),
    )(first_tok, w, b)


# ------------------------------- model assembly -------------------------------

class Config:
    vocab_size = 64
    hidden_size = 32
    num_hidden_layers = 2
    num_attention_heads = 4
    intermediate_size = 64
    max_position_embeddings = 32
    type_vocab_size = 2
    hidden_dropout_prob = 0.0       # dropout is identity (eval semantics)
    attention_probs_dropout_prob = 0.0


def init_params(cfg, key):
    H, I, L = cfg.hidden_size, cfg.intermediate_size, cfg.num_hidden_layers
    keys = iter(jax.random.split(key, 32))

    def w(shape, dtype=jnp.bfloat16):
        return (0.02 * jax.random.normal(next(keys), shape,
                                         jnp.float32)).astype(dtype)

    return {
        'word_emb': w((cfg.vocab_size, H), jnp.float32),
        'pos_emb':  w((cfg.max_position_embeddings, H), jnp.float32),
        'type_emb': w((cfg.type_vocab_size, H), jnp.float32),
        'emb_ln_g': jnp.ones((1, H), jnp.float32),
        'emb_ln_b': jnp.zeros((1, H), jnp.float32),
        # Per-layer weights stacked on a leading layer axis; matrices in bf16
        # (halves weight DMA / VMEM), biases & LayerNorm params in f32.
        'wqkv': w((L, H, 3 * H)),
        'bqkv': jnp.zeros((L, 1, 3 * H), jnp.float32),
        'wo':   w((L, H, H)),
        'bo':   jnp.zeros((L, 1, H), jnp.float32),
        'g1':   jnp.ones((L, 1, H), jnp.float32),
        'be1':  jnp.zeros((L, 1, H), jnp.float32),
        'w1':   w((L, H, I)),
        'b1':   jnp.zeros((L, 1, I), jnp.float32),
        'w2':   w((L, I, H)),
        'b2':   jnp.zeros((L, 1, H), jnp.float32),
        'g2':   jnp.ones((L, 1, H), jnp.float32),
        'be2':  jnp.zeros((L, 1, H), jnp.float32),
        'pool_w': w((H, H)),
        'pool_b': jnp.zeros((1, H), jnp.float32),
    }


def bert_forward(params, cfg, input_ids, token_type_ids=None,
                 attention_mask=None, block_batch=None):
    B, T = input_ids.shape
    H = cfg.hidden_size
    nh = cfg.num_attention_heads
    dh = H // nh
    if attention_mask is None:
        attention_mask = jnp.ones_like(input_ids)
    if token_type_ids is None:
        token_type_ids = jnp.zeros_like(input_ids)

    # Embedding lookups (data-dependent gathers) stay as plain-JAX glue.
    we = jnp.take(params['word_emb'], input_ids.reshape(-1), axis=0)
    te = jnp.take(params['type_emb'], token_type_ids.reshape(-1), axis=0)
    emb_sum = (we + te).reshape(B, T, H)
    pos_emb = params['pos_emb'][:T]                                   # (T, H)

    # Additive mask (HF-BERT style): 0 where attended, -10000 where masked.
    mask_add = ((1.0 - attention_mask.astype(jnp.float32))
                * -10000.0).reshape(B, 1, T)

    # Parameter prep (would be done once offline): fold 1/sqrt(dh) into the
    # q columns of the fused QKV projection -> no per-layer runtime scale.
    scale = 1.0 / math.sqrt(dh)
    p = dict(params)
    p['wqkv'] = params['wqkv'].at[:, :, :H].multiply(scale)
    p['bqkv'] = params['bqkv'].at[:, :, :H].multiply(scale)

    if block_batch is None:
        block_batch = _pick_block_batch(B, T)

    all_layers = run_encoder(emb_sum, pos_emb, params['emb_ln_g'],
                             params['emb_ln_b'], mask_add, p, nh,
                             block_batch)                             # (L,B,T,H) bf16
    L = all_layers.shape[0]
    # Cast back to f32 outside the hot kernel to match the reference dtype.
    encoded_layers = [all_layers[i].astype(jnp.float32) for i in range(L)]
    sequence_output = encoded_layers[-1]

    pooled_output = run_pooler(sequence_output[:, 0, :],
                               params['pool_w'], params['pool_b'])
    return pooled_output, sequence_output, encoded_layers


# ----------------------------------- main -------------------------------------

if __name__ == "__main__":
    cfg = Config()
    key = jax.random.PRNGKey(0)
    k_param, k_ids, k_types = jax.random.split(key, 3)

    params = init_params(cfg, k_param)

    B, T = 2, 8
    input_ids = jax.random.randint(k_ids, (B, T), 0, cfg.vocab_size,
                                   dtype=jnp.int32)
    token_type_ids = jax.random.randint(k_types, (B, T), 0,
                                        cfg.type_vocab_size, dtype=jnp.int32)
    attention_mask = jnp.ones((B, T), jnp.int32)

    # block_batch=1 exercises the (layer, batch-tile) grid with multiple tiles.
    pooled, seq_out, all_layers = bert_forward(
        params, cfg, input_ids, token_type_ids, attention_mask, block_batch=1)

    pooled = jax.block_until_ready(pooled)
    seq_out = jax.block_until_ready(seq_out)

    assert pooled.shape == (B, cfg.hidden_size)
    assert seq_out.shape == (B, T, cfg.hidden_size)
    assert len(all_layers) == cfg.num_hidden_layers
    assert jnp.all(jnp.isfinite(pooled)) and jnp.all(jnp.isfinite(seq_out))

    print("KERNEL_OK")
</pallas_src>

<mosaic_0001>
module attributes {stable_mosaic.version = 11 : i64} {
  func.func @encoder_kernel(%arg0: i32, %arg1: i32, %arg2: memref<1x8x32xf32, #tpu.memory_space<vmem>>, %arg3: memref<8x32xf32, #tpu.memory_space<vmem>>, %arg4: memref<1x32xf32, #tpu.memory_space<vmem>>, %arg5: memref<1x32xf32, #tpu.memory_space<vmem>>, %arg6: memref<1x1x8xf32, #tpu.memory_space<vmem>>, %arg7: memref<1x32x96xbf16, #tpu.memory_space<vmem>>, %arg8: memref<1x1x96xf32, #tpu.memory_space<vmem>>, %arg9: memref<1x32x32xbf16, #tpu.memory_space<vmem>>, %arg10: memref<1x1x32xf32, #tpu.memory_space<vmem>>, %arg11: memref<1x1x32xf32, #tpu.memory_space<vmem>>, %arg12: memref<1x1x32xf32, #tpu.memory_space<vmem>>, %arg13: memref<1x32x64xbf16, #tpu.memory_space<vmem>>, %arg14: memref<1x1x64xf32, #tpu.memory_space<vmem>>, %arg15: memref<1x64x32xbf16, #tpu.memory_space<vmem>>, %arg16: memref<1x1x32xf32, #tpu.memory_space<vmem>>, %arg17: memref<1x1x32xf32, #tpu.memory_space<vmem>>, %arg18: memref<1x1x32xf32, #tpu.memory_space<vmem>>, %arg19: memref<1x1x8x32xbf16, #tpu.memory_space<vmem>>, %arg20: memref<2x8x32xbf16, #tpu.memory_space<vmem>>, %arg21: memref<1x8x32xbf16, #tpu.memory_space<vmem>>) attributes {dimension_semantics = [#tpu.dimension_semantics<arbitrary>, #tpu.dimension_semantics<parallel>], iteration_bounds = array<i64: 2, 2>, scalar_prefetch = 0 : i64, scratch_operands = 2 : i64, tpu.core_type = #tpu.core_type<tc>, window_params = [{transform_indices = @transform_0, window_bounds = array<i64: 1, 8, 32>}, {pipeline_mode = #tpu.pipeline_mode<synchronous>, transform_indices = @transform_1, window_bounds = array<i64: 8, 32>}, {pipeline_mode = #tpu.pipeline_mode<synchronous>, transform_indices = @transform_2, window_bounds = array<i64: 1, 32>}, {pipeline_mode = #tpu.pipeline_mode<synchronous>, transform_indices = @transform_3, window_bounds = array<i64: 1, 32>}, {transform_indices = @transform_4, window_bounds = array<i64: 1, 1, 8>}, {transform_indices = @transform_5, window_bounds = array<i64: 1, 32, 96>}, {transform_indices = @transform_6, window_bounds = array<i64: 1, 1, 96>}, {transform_indices = @transform_7, window_bounds = array<i64: 1, 32, 32>}, {transform_indices = @transform_8, window_bounds = array<i64: 1, 1, 32>}, {transform_indices = @transform_9, window_bounds = array<i64: 1, 1, 32>}, {transform_indices = @transform_10, window_bounds = array<i64: 1, 1, 32>}, {transform_indices = @transform_11, window_bounds = array<i64: 1, 32, 64>}, {transform_indices = @transform_12, window_bounds = array<i64: 1, 1, 64>}, {transform_indices = @transform_13, window_bounds = array<i64: 1, 64, 32>}, {transform_indices = @transform_14, window_bounds = array<i64: 1, 1, 32>}, {transform_indices = @transform_15, window_bounds = array<i64: 1, 1, 32>}, {transform_indices = @transform_16, window_bounds = array<i64: 1, 1, 32>}, {transform_indices = @transform_17, window_bounds = array<i64: 1, 1, 8, 32>}]} {
    %c1_i32 = arith.constant 1 : i32
    %0 = arith.muli %arg1, %c1_i32 : i32
    %1 = tpu.assume_multiple %0, 1 : i32
    %c0_i32 = arith.constant 0 : i32
    %2 = arith.cmpi eq, %arg0, %c0_i32 : i32
    %3 = arith.extui %2 : i1 to i32
    %c0_i32_0 = arith.constant 0 : i32
    %4 = arith.cmpi ne, %3, %c0_i32_0 : i32
    scf.if %4 {
      %c0_92 = arith.constant 0 : index
      %c0_93 = arith.constant 0 : index
      %c0_94 = arith.constant 0 : index
      %205 = vector.load %arg2[%c0_92, %c0_93, %c0_94] : memref<1x8x32xf32, #tpu.memory_space<vmem>>, vector<1x8x32xf32>
      %c0_95 = arith.constant 0 : index
      %c0_96 = arith.constant 0 : index
      %206 = vector.load %arg3[%c0_95, %c0_96] : memref<8x32xf32, #tpu.memory_space<vmem>>, vector<8x32xf32>
      %207 = vector.shape_cast %206 : vector<8x32xf32> to vector<1x8x32xf32>
      %208 = arith.addf %205, %207 : vector<1x8x32xf32>
      %c0_97 = arith.constant 0 : index
      %c0_98 = arith.constant 0 : index
      %209 = vector.load %arg4[%c0_97, %c0_98] : memref<1x32xf32, #tpu.memory_space<vmem>>, vector<1x32xf32>
      %c0_99 = arith.constant 0 : index
      %c0_100 = arith.constant 0 : index
      %210 = vector.load %arg5[%c0_99, %c0_100] : memref<1x32xf32, #tpu.memory_space<vmem>>, vector<1x32xf32>
      %cst_101 = arith.constant dense<0.000000e+00> : vector<1x8xf32>
      %211 = vector.multi_reduction <add>, %208, %cst_101 [2] : vector<1x8x32xf32> to vector<1x8xf32>
      %212 = vector.shape_cast %211 : vector<1x8xf32> to vector<1x8x1xf32>
      %cst_102 = arith.constant 3.200000e+01 : f32
      %213 = vector.broadcast %cst_102 : f32 to vector<1x8x1xf32>
      %214 = arith.divf %212, %213 : vector<1x8x1xf32>
      %215 = vector.broadcast %214 : vector<1x8x1xf32> to vector<1x8x32xf32>
      %216 = arith.subf %208, %215 : vector<1x8x32xf32>
      %217 = arith.mulf %216, %216 : vector<1x8x32xf32>
      %cst_103 = arith.constant dense<0.000000e+00> : vector<1x8xf32>
      %218 = vector.multi_reduction <add>, %217, %cst_103 [2] : vector<1x8x32xf32> to vector<1x8xf32>
      %219 = vector.shape_cast %218 : vector<1x8xf32> to vector<1x8x1xf32>
      %cst_104 = arith.constant 3.200000e+01 : f32
      %220 = vector.broadcast %cst_104 : f32 to vector<1x8x1xf32>
      %221 = arith.divf %219, %220 : vector<1x8x1xf32>
      %222 = vector.broadcast %214 : vector<1x8x1xf32> to vector<1x8x32xf32>
      %223 = arith.subf %208, %222 : vector<1x8x32xf32>
      %cst_105 = arith.constant 9.99999996E-13 : f32
      %224 = vector.broadcast %cst_105 : f32 to vector<1x8x1xf32>
      %225 = arith.addf %221, %224 : vector<1x8x1xf32>
      %226 = math.rsqrt %225 : vector<1x8x1xf32>
      %227 = vector.broadcast %226 : vector<1x8x1xf32> to vector<1x8x32xf32>
      %228 = arith.mulf %223, %227 : vector<1x8x32xf32>
      %229 = vector.shape_cast %209 : vector<1x32xf32> to vector<1x1x32xf32>
      %230 = vector.broadcast %229 : vector<1x1x32xf32> to vector<1x8x32xf32>
      %231 = arith.mulf %228, %230 : vector<1x8x32xf32>
      %232 = vector.shape_cast %210 : vector<1x32xf32> to vector<1x1x32xf32>
      %233 = vector.broadcast %232 : vector<1x1x32xf32> to vector<1x8x32xf32>
      %234 = arith.addf %231, %233 : vector<1x8x32xf32>
      %235 = arith.truncf %234 : vector<1x8x32xf32> to vector<1x8x32xbf16>
      %236 = arith.index_cast %1 : i32 to index
      %c0_106 = arith.constant 0 : index
      %c0_107 = arith.constant 0 : index
      %237 = vector.load %arg20[%236, %c0_106, %c0_107] : memref<2x8x32xbf16, #tpu.memory_space<vmem>>, vector<1x8x32xbf16>
      tpu.vector_store %arg20[%236, %c0_106, %c0_107], %235 {strides = array<i32>} : memref<2x8x32xbf16, #tpu.memory_space<vmem>>, vector<1x8x32xbf16>,
    } else {
    }
    %5 = arith.index_cast %1 : i32 to index
    %c0 = arith.constant 0 : index
    %c0_1 = arith.constant 0 : index
    %6 = vector.load %arg20[%5, %c0, %c0_1] : memref<2x8x32xbf16, #tpu.memory_space<vmem>>, vector<1x8x32xbf16>
    %7 = vector.shape_cast %6 : vector<1x8x32xbf16> to vector<8x32xbf16>
    %c0_2 = arith.constant 0 : index
    %c0_3 = arith.constant 0 : index
    %c0_4 = arith.constant 0 : index
    %8 = vector.load %arg7[%c0_2, %c0_3, %c0_4] : memref<1x32x96xbf16, #tpu.memory_space<vmem>>, vector<1x32x96xbf16>
    %9 = vector.shape_cast %8 : vector<1x32x96xbf16> to vector<32x96xbf16>
    %cst = arith.constant dense<0.000000e+00> : vector<8x96xf32>
    %10 = tpu.matmul %7, %9, %cst {dimension_numbers = #tpu.dot_dimension_numbers<[1], [0], [0], [1], [0, 0, 1, 1], [], []>} : vector<8x32xbf16>, vector<32x96xbf16>, vector<8x96xf32> -> vector<8x96xf32>
    %c0_5 = arith.constant 0 : index
    %c0_6 = arith.constant 0 : index
    %c0_7 = arith.constant 0 : index
    %11 = vector.load %arg8[%c0_5, %c0_6, %c0_7] : memref<1x1x96xf32, #tpu.memory_space<vmem>>, vector<1x1x96xf32>
    %12 = vector.shape_cast %11 : vector<1x1x96xf32> to vector<1x96xf32>
    %13 = vector.broadcast %12 : vector<1x96xf32> to vector<8x96xf32>
    %14 = arith.addf %10, %13 : vector<8x96xf32>
    %15 = vector.extract_strided_slice %14 {offsets = [0, 0], sizes = [8, 32], strides = [1, 1]} : vector<8x96xf32> to vector<8x32xf32>
    %16 = vector.shape_cast %15 : vector<8x32xf32> to vector<1x8x32xf32>
    %17 = arith.truncf %16 : vector<1x8x32xf32> to vector<1x8x32xbf16>
    %18 = vector.extract_strided_slice %14 {offsets = [0, 32], sizes = [8, 32], strides = [1, 1]} : vector<8x96xf32> to vector<8x32xf32>
    %19 = vector.shape_cast %18 : vector<8x32xf32> to vector<1x8x32xf32>
    %20 = arith.truncf %19 : vector<1x8x32xf32> to vector<1x8x32xbf16>
    %21 = vector.extract_strided_slice %14 {offsets = [0, 64], sizes = [8, 32], strides = [1, 1]} : vector<8x96xf32> to vector<8x32xf32>
    %22 = vector.shape_cast %21 : vector<8x32xf32> to vector<1x8x32xf32>
    %23 = arith.truncf %22 : vector<1x8x32xf32> to vector<1x8x32xbf16>
    %c0_8 = arith.constant 0 : index
    %c0_9 = arith.constant 0 : index
    %c0_10 = arith.constant 0 : index
    %24 = vector.load %arg6[%c0_8, %c0_9, %c0_10] : memref<1x1x8xf32, #tpu.memory_space<vmem>>, vector<1x1x8xf32>
    %25 = vector.extract_strided_slice %17 {offsets = [0, 0, 0], sizes = [1, 8, 8], strides = [1, 1, 1]} : vector<1x8x32xbf16> to vector<1x8x8xbf16>
    %26 = vector.extract_strided_slice %20 {offsets = [0, 0, 0], sizes = [1, 8, 8], strides = [1, 1, 1]} : vector<1x8x32xbf16> to vector<1x8x8xbf16>
    "tpu.trace_start"() <{level = 10 : i32, message = "btd,bsd->bts"}> : () -> ()
    %cst_11 = arith.constant dense<0.000000e+00> : vector<1x8x8xf32>
    %27 = tpu.matmul %25, %26, %cst_11 {dimension_numbers = #tpu.dot_dimension_numbers<[2], [2], [1], [1], [0, 0, 0, 1, 1, 1], [0], [0]>} : vector<1x8x8xbf16>, vector<1x8x8xbf16>, vector<1x8x8xf32> -> vector<1x8x8xf32>
    "tpu.trace_stop"() : () -> ()
    %28 = vector.broadcast %24 : vector<1x1x8xf32> to vector<1x8x8xf32>
    %29 = arith.addf %27, %28 : vector<1x8x8xf32>
    %cst_12 = arith.constant dense<0xFF800000> : vector<1x8xf32>
    %30 = vector.multi_reduction <maximumf>, %29, %cst_12 [2] : vector<1x8x8xf32> to vector<1x8xf32>
    %31 = vector.shape_cast %30 : vector<1x8xf32> to vector<1x8x1xf32>
    %32 = vector.broadcast %31 : vector<1x8x1xf32> to vector<1x8x8xf32>
    %33 = arith.subf %29, %32 : vector<1x8x8xf32>
    %34 = math.exp %33 : vector<1x8x8xf32>
    %cst_13 = arith.constant dense<0.000000e+00> : vector<1x8xf32>
    %35 = vector.multi_reduction <add>, %34, %cst_13 [2] : vector<1x8x8xf32> to vector<1x8xf32>
    %36 = vector.shape_cast %35 : vector<1x8xf32> to vector<1x8x1xf32>
    %37 = tpu.reciprocal %36 {approx = true} : vector<1x8x1xf32> -> vector<1x8x1xf32>
    %38 = vector.broadcast %37 : vector<1x8x1xf32> to vector<1x8x8xf32>
    %39 = arith.mulf %34, %38 : vector<1x8x8xf32>
    %40 = arith.truncf %39 : vector<1x8x8xf32> to vector<1x8x8xbf16>
    %41 = vector.extract_strided_slice %23 {offsets = [0, 0, 0], sizes = [1, 8, 8], strides = [1, 1, 1]} : vector<1x8x32xbf16> to vector<1x8x8xbf16>
    "tpu.trace_start"() <{level = 10 : i32, message = "bts,bsd->btd"}> : () -> ()
    %cst_14 = arith.constant dense<0.000000e+00> : vector<1x8x8xf32>
    %42 = tpu.matmul %40, %41, %cst_14 {dimension_numbers = #tpu.dot_dimension_numbers<[2], [1], [1], [2], [0, 0, 0, 1, 1, 2], [0], [0]>} : vector<1x8x8xbf16>, vector<1x8x8xbf16>, vector<1x8x8xf32> -> vector<1x8x8xf32>
    "tpu.trace_stop"() : () -> ()
    %43 = arith.truncf %42 : vector<1x8x8xf32> to vector<1x8x8xbf16>
    %c0_15 = arith.constant 0 : index
    %c0_16 = arith.constant 0 : index
    %c0_17 = arith.constant 0 : index
    %44 = vector.load %arg21[%c0_15, %c0_16, %c0_17] : memref<1x8x32xbf16, #tpu.memory_space<vmem>>, vector<1x8x8xbf16>
    tpu.vector_store %arg21[%c0_15, %c0_16, %c0_17], %43 {strides = array<i32>} : memref<1x8x32xbf16, #tpu.memory_space<vmem>>, vector<1x8x8xbf16>,
    %45 = vector.extract_strided_slice %17 {offsets = [0, 0, 8], sizes = [1, 8, 8], strides = [1, 1, 1]} : vector<1x8x32xbf16> to vector<1x8x8xbf16>
    %46 = vector.extract_strided_slice %20 {offsets = [0, 0, 8], sizes = [1, 8, 8], strides = [1, 1, 1]} : vector<1x8x32xbf16> to vector<1x8x8xbf16>
    "tpu.trace_start"() <{level = 10 : i32, message = "btd,bsd->bts"}> : () -> ()
    %cst_18 = arith.constant dense<0.000000e+00> : vector<1x8x8xf32>
    %47 = tpu.matmul %45, %46, %cst_18 {dimension_numbers = #tpu.dot_dimension_numbers<[2], [2], [1], [1], [0, 0, 0, 1, 1, 1], [0], [0]>} : vector<1x8x8xbf16>, vector<1x8x8xbf16>, vector<1x8x8xf32> -> vector<1x8x8xf32>
    "tpu.trace_stop"() : () -> ()
    %48 = vector.broadcast %24 : vector<1x1x8xf32> to vector<1x8x8xf32>
    %49 = arith.addf %47, %48 : vector<1x8x8xf32>
    %cst_19 = arith.constant dense<0xFF800000> : vector<1x8xf32>
    %50 = vector.multi_reduction <maximumf>, %49, %cst_19 [2] : vector<1x8x8xf32> to vector<1x8xf32>
    %51 = vector.shape_cast %50 : vector<1x8xf32> to vector<1x8x1xf32>
    %52 = vector.broadcast %51 : vector<1x8x1xf32> to vector<1x8x8xf32>
    %53 = arith.subf %49, %52 : vector<1x8x8xf32>
    %54 = math.exp %53 : vector<1x8x8xf32>
    %cst_20 = arith.constant dense<0.000000e+00> : vector<1x8xf32>
    %55 = vector.multi_reduction <add>, %54, %cst_20 [2] : vector<1x8x8xf32> to vector<1x8xf32>
    %56 = vector.shape_cast %55 : vector<1x8xf32> to vector<1x8x1xf32>
    %57 = tpu.reciprocal %56 {approx = true} : vector<1x8x1xf32> -> vector<1x8x1xf32>
    %58 = vector.broadcast %57 : vector<1x8x1xf32> to vector<1x8x8xf32>
    %59 = arith.mulf %54, %58 : vector<1x8x8xf32>
    %60 = arith.truncf %59 : vector<1x8x8xf32> to vector<1x8x8xbf16>
    %61 = vector.extract_strided_slice %23 {offsets = [0, 0, 8], sizes = [1, 8, 8], strides = [1, 1, 1]} : vector<1x8x32xbf16> to vector<1x8x8xbf16>
    "tpu.trace_start"() <{level = 10 : i32, message = "bts,bsd->btd"}> : () -> ()
    %cst_21 = arith.constant dense<0.000000e+00> : vector<1x8x8xf32>
    %62 = tpu.matmul %60, %61, %cst_21 {dimension_numbers = #tpu.dot_dimension_numbers<[2], [1], [1], [2], [0, 0, 0, 1, 1, 2], [0], [0]>} : vector<1x8x8xbf16>, vector<1x8x8xbf16>, vector<1x8x8xf32> -> vector<1x8x8xf32>
    "tpu.trace_stop"() : () -> ()
    %63 = arith.truncf %62 : vector<1x8x8xf32> to vector<1x8x8xbf16>
    %c0_22 = arith.constant 0 : index
    %c0_23 = arith.constant 0 : index
    %c8 = arith.constant 8 : index
    %64 = vector.load %arg21[%c0_22, %c0_23, %c8] : memref<1x8x32xbf16, #tpu.memory_space<vmem>>, vector<1x8x8xbf16>
    tpu.vector_store %arg21[%c0_22, %c0_23, %c8], %63 {strides = array<i32>} : memref<1x8x32xbf16, #tpu.memory_space<vmem>>, vector<1x8x8xbf16>,
    %65 = vector.extract_strided_slice %17 {offsets = [0, 0, 16], sizes = [1, 8, 8], strides = [1, 1, 1]} : vector<1x8x32xbf16> to vector<1x8x8xbf16>
    %66 = vector.extract_strided_slice %20 {offsets = [0, 0, 16], sizes = [1, 8, 8], strides = [1, 1, 1]} : vector<1x8x32xbf16> to vector<1x8x8xbf16>
    "tpu.trace_start"() <{level = 10 : i32, message = "btd,bsd->bts"}> : () -> ()
    %cst_24 = arith.constant dense<0.000000e+00> : vector<1x8x8xf32>
    %67 = tpu.matmul %65, %66, %cst_24 {dimension_numbers = #tpu.dot_dimension_numbers<[2], [2], [1], [1], [0, 0, 0, 1, 1, 1], [0], [0]>} : vector<1x8x8xbf16>, vector<1x8x8xbf16>, vector<1x8x8xf32> -> vector<1x8x8xf32>
    "tpu.trace_stop"() : () -> ()
    %68 = vector.broadcast %24 : vector<1x1x8xf32> to vector<1x8x8xf32>
    %69 = arith.addf %67, %68 : vector<1x8x8xf32>
    %cst_25 = arith.constant dense<0xFF800000> : vector<1x8xf32>
    %70 = vector.multi_reduction <maximumf>, %69, %cst_25 [2] : vector<1x8x8xf32> to vector<1x8xf32>
    %71 = vector.shape_cast %70 : vector<1x8xf32> to vector<1x8x1xf32>
    %72 = vector.broadcast %71 : vector<1x8x1xf32> to vector<1x8x8xf32>
    %73 = arith.subf %69, %72 : vector<1x8x8xf32>
    %74 = math.exp %73 : vector<1x8x8xf32>
    %cst_26 = arith.constant dense<0.000000e+00> : vector<1x8xf32>
    %75 = vector.multi_reduction <add>, %74, %cst_26 [2] : vector<1x8x8xf32> to vector<1x8xf32>
    %76 = vector.shape_cast %75 : vector<1x8xf32> to vector<1x8x1xf32>
    %77 = tpu.reciprocal %76 {approx = true} : vector<1x8x1xf32> -> vector<1x8x1xf32>
    %78 = vector.broadcast %77 : vector<1x8x1xf32> to vector<1x8x8xf32>
    %79 = arith.mulf %74, %78 : vector<1x8x8xf32>
    %80 = arith.truncf %79 : vector<1x8x8xf32> to vector<1x8x8xbf16>
    %81 = vector.extract_strided_slice %23 {offsets = [0, 0, 16], sizes = [1, 8, 8], strides = [1, 1, 1]} : vector<1x8x32xbf16> to vector<1x8x8xbf16>
    "tpu.trace_start"() <{level = 10 : i32, message = "bts,bsd->btd"}> : () -> ()
    %cst_27 = arith.constant dense<0.000000e+00> : vector<1x8x8xf32>
    %82 = tpu.matmul %80, %81, %cst_27 {dimension_numbers = #tpu.dot_dimension_numbers<[2], [1], [1], [2], [0, 0, 0, 1, 1, 2], [0], [0]>} : vector<1x8x8xbf16>, vector<1x8x8xbf16>, vector<1x8x8xf32> -> vector<1x8x8xf32>
    "tpu.trace_stop"() : () -> ()
    %83 = arith.truncf %82 : vector<1x8x8xf32> to vector<1x8x8xbf16>
    %c0_28 = arith.constant 0 : index
    %c0_29 = arith.constant 0 : index
    %c16 = arith.constant 16 : index
    %84 = vector.load %arg21[%c0_28, %c0_29, %c16] : memref<1x8x32xbf16, #tpu.memory_space<vmem>>, vector<1x8x8xbf16>
    tpu.vector_store %arg21[%c0_28, %c0_29, %c16], %83 {strides = array<i32>} : memref<1x8x32xbf16, #tpu.memory_space<vmem>>, vector<1x8x8xbf16>,
    %85 = vector.extract_strided_slice %17 {offsets = [0, 0, 24], sizes = [1, 8, 8], strides = [1, 1, 1]} : vector<1x8x32xbf16> to vector<1x8x8xbf16>
    %86 = vector.extract_strided_slice %20 {offsets = [0, 0, 24], sizes = [1, 8, 8], strides = [1, 1, 1]} : vector<1x8x32xbf16> to vector<1x8x8xbf16>
    "tpu.trace_start"() <{level = 10 : i32, message = "btd,bsd->bts"}> : () -> ()
    %cst_30 = arith.constant dense<0.000000e+00> : vector<1x8x8xf32>
    %87 = tpu.matmul %85, %86, %cst_30 {dimension_numbers = #tpu.dot_dimension_numbers<[2], [2], [1], [1], [0, 0, 0, 1, 1, 1], [0], [0]>} : vector<1x8x8xbf16>, vector<1x8x8xbf16>, vector<1x8x8xf32> -> vector<1x8x8xf32>
    "tpu.trace_stop"() : () -> ()
    %88 = vector.broadcast %24 : vector<1x1x8xf32> to vector<1x8x8xf32>
    %89 = arith.addf %87, %88 : vector<1x8x8xf32>
    %cst_31 = arith.constant dense<0xFF800000> : vector<1x8xf32>
    %90 = vector.multi_reduction <maximumf>, %89, %cst_31 [2] : vector<1x8x8xf32> to vector<1x8xf32>
    %91 = vector.shape_cast %90 : vector<1x8xf32> to vector<1x8x1xf32>
    %92 = vector.broadcast %91 : vector<1x8x1xf32> to vector<1x8x8xf32>
    %93 = arith.subf %89, %92 : vector<1x8x8xf32>
    %94 = math.exp %93 : vector<1x8x8xf32>
    %cst_32 = arith.constant dense<0.000000e+00> : vector<1x8xf32>
    %95 = vector.multi_reduction <add>, %94, %cst_32 [2] : vector<1x8x8xf32> to vector<1x8xf32>
    %96 = vector.shape_cast %95 : vector<1x8xf32> to vector<1x8x1xf32>
    %97 = tpu.reciprocal %96 {approx = true} : vector<1x8x1xf32> -> vector<1x8x1xf32>
    %98 = vector.broadcast %97 : vector<1x8x1xf32> to vector<1x8x8xf32>
    %99 = arith.mulf %94, %98 : vector<1x8x8xf32>
    %100 = arith.truncf %99 : vector<1x8x8xf32> to vector<1x8x8xbf16>
    %101 = vector.extract_strided_slice %23 {offsets = [0, 0, 24], sizes = [1, 8, 8], strides = [1, 1, 1]} : vector<1x8x32xbf16> to vector<1x8x8xbf16>
    "tpu.trace_start"() <{level = 10 : i32, message = "bts,bsd->btd"}> : () -> ()
    %cst_33 = arith.constant dense<0.000000e+00> : vector<1x8x8xf32>
    %102 = tpu.matmul %100, %101, %cst_33 {dimension_numbers = #tpu.dot_dimension_numbers<[2], [1], [1], [2], [0, 0, 0, 1, 1, 2], [0], [0]>} : vector<1x8x8xbf16>, vector<1x8x8xbf16>, vector<1x8x8xf32> -> vector<1x8x8xf32>
    "tpu.trace_stop"() : () -> ()
    %103 = arith.truncf %102 : vector<1x8x8xf32> to vector<1x8x8xbf16>
    %c0_34 = arith.constant 0 : index
    %c0_35 = arith.constant 0 : index
    %c24 = arith.constant 24 : index
    %104 = vector.load %arg21[%c0_34, %c0_35, %c24] : memref<1x8x32xbf16, #tpu.memory_space<vmem>>, vector<1x8x8xbf16>
    tpu.vector_store %arg21[%c0_34, %c0_35, %c24], %103 {strides = array<i32>} : memref<1x8x32xbf16, #tpu.memory_space<vmem>>, vector<1x8x8xbf16>,
    %c0_36 = arith.constant 0 : index
    %c0_37 = arith.constant 0 : index
    %c0_38 = arith.constant 0 : index
    %105 = vector.load %arg21[%c0_36, %c0_37, %c0_38] : memref<1x8x32xbf16, #tpu.memory_space<vmem>>, vector<1x8x32xbf16>
    %106 = vector.shape_cast %105 : vector<1x8x32xbf16> to vector<8x32xbf16>
    %c0_39 = arith.constant 0 : index
    %c0_40 = arith.constant 0 : index
    %c0_41 = arith.constant 0 : index
    %107 = vector.load %arg9[%c0_39, %c0_40, %c0_41] : memref<1x32x32xbf16, #tpu.memory_space<vmem>>, vector<1x32x32xbf16>
    %108 = vector.shape_cast %107 : vector<1x32x32xbf16> to vector<32x32xbf16>
    %cst_42 = arith.constant dense<0.000000e+00> : vector<8x32xf32>
    %109 = tpu.matmul %106, %108, %cst_42 {dimension_numbers = #tpu.dot_dimension_numbers<[1], [0], [0], [1], [0, 0, 1, 1], [], []>} : vector<8x32xbf16>, vector<32x32xbf16>, vector<8x32xf32> -> vector<8x32xf32>
    %c0_43 = arith.constant 0 : index
    %c0_44 = arith.constant 0 : index
    %c0_45 = arith.constant 0 : index
    %110 = vector.load %arg10[%c0_43, %c0_44, %c0_45] : memref<1x1x32xf32, #tpu.memory_space<vmem>>, vector<1x1x32xf32>
    %111 = vector.shape_cast %110 : vector<1x1x32xf32> to vector<1x32xf32>
    %112 = vector.broadcast %111 : vector<1x32xf32> to vector<8x32xf32>
    %113 = arith.addf %109, %112 : vector<8x32xf32>
    %114 = arith.extf %7 : vector<8x32xbf16> to vector<8x32xf32>
    %115 = arith.addf %113, %114 : vector<8x32xf32>
    %c0_46 = arith.constant 0 : index
    %c0_47 = arith.constant 0 : index
    %c0_48 = arith.constant 0 : index
    %116 = vector.load %arg11[%c0_46, %c0_47, %c0_48] : memref<1x1x32xf32, #tpu.memory_space<vmem>>, vector<1x1x32xf32>
    %117 = vector.shape_cast %116 : vector<1x1x32xf32> to vector<1x32xf32>
    %c0_49 = arith.constant 0 : index
    %c0_50 = arith.constant 0 : index
    %c0_51 = arith.constant 0 : index
    %118 = vector.load %arg12[%c0_49, %c0_50, %c0_51] : memref<1x1x32xf32, #tpu.memory_space<vmem>>, vector<1x1x32xf32>
    %119 = vector.shape_cast %118 : vector<1x1x32xf32> to vector<1x32xf32>
    %cst_52 = arith.constant dense<0.000000e+00> : vector<8xf32>
    %120 = vector.multi_reduction <add>, %115, %cst_52 [1] : vector<8x32xf32> to vector<8xf32>
    %121 = vector.shape_cast %120 : vector<8xf32> to vector<8x1xf32>
    %cst_53 = arith.constant 3.200000e+01 : f32
    %122 = vector.broadcast %cst_53 : f32 to vector<8x1xf32>
    %123 = arith.divf %121, %122 : vector<8x1xf32>
    %124 = vector.broadcast %123 : vector<8x1xf32> to vector<8x32xf32>
    %125 = arith.subf %115, %124 : vector<8x32xf32>
    %126 = arith.mulf %125, %125 : vector<8x32xf32>
    %cst_54 = arith.constant dense<0.000000e+00> : vector<8xf32>
    %127 = vector.multi_reduction <add>, %126, %cst_54 [1] : vector<8x32xf32> to vector<8xf32>
    %128 = vector.shape_cast %127 : vector<8xf32> to vector<8x1xf32>
    %cst_55 = arith.constant 3.200000e+01 : f32
    %129 = vector.broadcast %cst_55 : f32 to vector<8x1xf32>
    %130 = arith.divf %128, %129 : vector<8x1xf32>
    %131 = vector.broadcast %123 : vector<8x1xf32> to vector<8x32xf32>
    %132 = arith.subf %115, %131 : vector<8x32xf32>
    %cst_56 = arith.constant 9.99999996E-13 : f32
    %133 = vector.broadcast %cst_56 : f32 to vector<8x1xf32>
    %134 = arith.addf %130, %133 : vector<8x1xf32>
    %135 = math.rsqrt %134 : vector<8x1xf32>
    %136 = vector.broadcast %135 : vector<8x1xf32> to vector<8x32xf32>
    %137 = arith.mulf %132, %136 : vector<8x32xf32>
    %138 = vector.broadcast %117 : vector<1x32xf32> to vector<8x32xf32>
    %139 = arith.mulf %137, %138 : vector<8x32xf32>
    %140 = vector.broadcast %119 : vector<1x32xf32> to vector<8x32xf32>
    %141 = arith.addf %139, %140 : vector<8x32xf32>
    %142 = arith.truncf %141 : vector<8x32xf32> to vector<8x32xbf16>
    %c0_57 = arith.constant 0 : index
    %c0_58 = arith.constant 0 : index
    %c0_59 = arith.constant 0 : index
    %143 = vector.load %arg13[%c0_57, %c0_58, %c0_59] : memref<1x32x64xbf16, #tpu.memory_space<vmem>>, vector<1x32x64xbf16>
    %144 = vector.shape_cast %143 : vector<1x32x64xbf16> to vector<32x64xbf16>
    %cst_60 = arith.constant dense<0.000000e+00> : vector<8x64xf32>
    %145 = tpu.matmul %142, %144, %cst_60 {dimension_numbers = #tpu.dot_dimension_numbers<[1], [0], [0], [1], [0, 0, 1, 1], [], []>} : vector<8x32xbf16>, vector<32x64xbf16>, vector<8x64xf32> -> vector<8x64xf32>
    %c0_61 = arith.constant 0 : index
    %c0_62 = arith.constant 0 : index
    %c0_63 = arith.constant 0 : index
    %146 = vector.load %arg14[%c0_61, %c0_62, %c0_63] : memref<1x1x64xf32, #tpu.memory_space<vmem>>, vector<1x1x64xf32>
    %147 = vector.shape_cast %146 : vector<1x1x64xf32> to vector<1x64xf32>
    %148 = vector.broadcast %147 : vector<1x64xf32> to vector<8x64xf32>
    %149 = arith.addf %145, %148 : vector<8x64xf32>
    %cst_64 = arith.constant 5.000000e-01 : f32
    %150 = vector.broadcast %cst_64 : f32 to vector<8x64xf32>
    %151 = arith.mulf %150, %149 : vector<8x64xf32>
    %152 = arith.mulf %149, %149 : vector<8x64xf32>
    %153 = arith.mulf %149, %152 : vector<8x64xf32>
    %cst_65 = arith.constant 4.471500e-02 : f32
    %154 = vector.broadcast %cst_65 : f32 to vector<8x64xf32>
    %155 = arith.mulf %154, %153 : vector<8x64xf32>
    %156 = arith.addf %149, %155 : vector<8x64xf32>
    %cst_66 = arith.constant 0.797884583 : f32
    %157 = vector.broadcast %cst_66 : f32 to vector<8x64xf32>
    %158 = arith.mulf %157, %156 : vector<8x64xf32>
    %159 = math.tanh %158 : vector<8x64xf32>
    %cst_67 = arith.constant 1.000000e+00 : f32
    %160 = vector.broadcast %cst_67 : f32 to vector<8x64xf32>
    %161 = arith.addf %160, %159 : vector<8x64xf32>
    %162 = arith.mulf %151, %161 : vector<8x64xf32>
    %163 = arith.truncf %162 : vector<8x64xf32> to vector<8x64xbf16>
    %c0_68 = arith.constant 0 : index
    %c0_69 = arith.constant 0 : index
    %c0_70 = arith.constant 0 : index
    %164 = vector.load %arg15[%c0_68, %c0_69, %c0_70] : memref<1x64x32xbf16, #tpu.memory_space<vmem>>, vector<1x64x32xbf16>
    %165 = vector.shape_cast %164 : vector<1x64x32xbf16> to vector<64x32xbf16>
    %cst_71 = arith.constant dense<0.000000e+00> : vector<8x32xf32>
    %166 = tpu.matmul %163, %165, %cst_71 {dimension_numbers = #tpu.dot_dimension_numbers<[1], [0], [0], [1], [0, 0, 1, 1], [], []>} : vector<8x64xbf16>, vector<64x32xbf16>, vector<8x32xf32> -> vector<8x32xf32>
    %c0_72 = arith.constant 0 : index
    %c0_73 = arith.constant 0 : index
    %c0_74 = arith.constant 0 : index
    %167 = vector.load %arg16[%c0_72, %c0_73, %c0_74] : memref<1x1x32xf32, #tpu.memory_space<vmem>>, vector<1x1x32xf32>
    %168 = vector.shape_cast %167 : vector<1x1x32xf32> to vector<1x32xf32>
    %169 = vector.broadcast %168 : vector<1x32xf32> to vector<8x32xf32>
    %170 = arith.addf %166, %169 : vector<8x32xf32>
    %171 = arith.addf %170, %141 : vector<8x32xf32>
    %c0_75 = arith.constant 0 : index
    %c0_76 = arith.constant 0 : index
    %c0_77 = arith.constant 0 : index
    %172 = vector.load %arg17[%c0_75, %c0_76, %c0_77] : memref<1x1x32xf32, #tpu.memory_space<vmem>>, vector<1x1x32xf32>
    %173 = vector.shape_cast %172 : vector<1x1x32xf32> to vector<1x32xf32>
    %c0_78 = arith.constant 0 : index
    %c0_79 = arith.constant 0 : index
    %c0_80 = arith.constant 0 : index
    %174 = vector.load %arg18[%c0_78, %c0_79, %c0_80] : memref<1x1x32xf32, #tpu.memory_space<vmem>>, vector<1x1x32xf32>
    %175 = vector.shape_cast %174 : vector<1x1x32xf32> to vector<1x32xf32>
    %cst_81 = arith.constant dense<0.000000e+00> : vector<8xf32>
    %176 = vector.multi_reduction <add>, %171, %cst_81 [1] : vector<8x32xf32> to vector<8xf32>
    %177 = vector.shape_cast %176 : vector<8xf32> to vector<8x1xf32>
    %cst_82 = arith.constant 3.200000e+01 : f32
    %178 = vector.broadcast %cst_82 : f32 to vector<8x1xf32>
    %179 = arith.divf %177, %178 : vector<8x1xf32>
    %180 = vector.broadcast %179 : vector<8x1xf32> to vector<8x32xf32>
    %181 = arith.subf %171, %180 : vector<8x32xf32>
    %182 = arith.mulf %181, %181 : vector<8x32xf32>
    %cst_83 = arith.constant dense<0.000000e+00> : vector<8xf32>
    %183 = vector.multi_reduction <add>, %182, %cst_83 [1] : vector<8x32xf32> to vector<8xf32>
    %184 = vector.shape_cast %183 : vector<8xf32> to vector<8x1xf32>
    %cst_84 = arith.constant 3.200000e+01 : f32
    %185 = vector.broadcast %cst_84 : f32 to vector<8x1xf32>
    %186 = arith.divf %184, %185 : vector<8x1xf32>
    %187 = vector.broadcast %179 : vector<8x1xf32> to vector<8x32xf32>
    %188 = arith.subf %171, %187 : vector<8x32xf32>
    %cst_85 = arith.constant 9.99999996E-13 : f32
    %189 = vector.broadcast %cst_85 : f32 to vector<8x1xf32>
    %190 = arith.addf %186, %189 : vector<8x1xf32>
    %191 = math.rsqrt %190 : vector<8x1xf32>
    %192 = vector.broadcast %191 : vector<8x1xf32> to vector<8x32xf32>
    %193 = arith.mulf %188, %192 : vector<8x32xf32>
    %194 = vector.broadcast %173 : vector<1x32xf32> to vector<8x32xf32>
    %195 = arith.mulf %193, %194 : vector<8x32xf32>
    %196 = vector.broadcast %175 : vector<1x32xf32> to vector<8x32xf32>
    %197 = arith.addf %195, %196 : vector<8x32xf32>
    %198 = arith.truncf %197 : vector<8x32xf32> to vector<8x32xbf16>
    %199 = vector.shape_cast %198 : vector<8x32xbf16> to vector<1x8x32xbf16>
    %200 = arith.index_cast %1 : i32 to index
    %c0_86 = arith.constant 0 : index
    %c0_87 = arith.constant 0 : index
    %201 = vector.load %arg20[%200, %c0_86, %c0_87] : memref<2x8x32xbf16, #tpu.memory_space<vmem>>, vector<1x8x32xbf16>
    tpu.vector_store %arg20[%200, %c0_86, %c0_87], %199 {strides = array<i32>} : memref<2x8x32xbf16, #tpu.memory_space<vmem>>, vector<1x8x32xbf16>,
    %c0_88 = arith.constant 0 : index
    %c0_89 = arith.constant 0 : index
    %c0_90 = arith.constant 0 : index
    %c0_91 = arith.constant 0 : index
    %202 = vector.load %arg19[%c0_88, %c0_89, %c0_90, %c0_91] : memref<1x1x8x32xbf16, #tpu.memory_space<vmem>>, vector<1x1x8x32xbf16>
    %203 = vector.shape_cast %202 : vector<1x1x8x32xbf16> to vector<1x8x32xbf16>
    %204 = vector.shape_cast %199 : vector<1x8x32xbf16> to vector<1x1x8x32xbf16>
    tpu.vector_store %arg19[%c0_88, %c0_89, %c0_90, %c0_91], %204 {strides = array<i32>} : memref<1x1x8x32xbf16, #tpu.memory_space<vmem>>, vector<1x1x8x32xbf16>,
    return
  }
  func.func @transform_0(%arg0: i32, %arg1: i32) -> (i32, i32, i32) {
    %c0_i32 = arith.constant 0 : i32
    %c0_i32_0 = arith.constant 0 : i32
    %c0_i32_1 = arith.constant 0 : i32
    return %arg1, %c0_i32, %c0_i32_0 : i32, i32, i32
  }
  func.func @transform_1(%arg0: i32, %arg1: i32) -> (i32, i32) {
    %c0_i32 = arith.constant 0 : i32
    %c0_i32_0 = arith.constant 0 : i32
    %c0_i32_1 = arith.constant 0 : i32
    return %c0_i32, %c0_i32_0 : i32, i32
  }
  func.func @transform_2(%arg0: i32, %arg1: i32) -> (i32, i32) {
    %c0_i32 = arith.constant 0 : i32
    %c0_i32_0 = arith.constant 0 : i32
    %c0_i32_1 = arith.constant 0 : i32
    return %c0_i32, %c0_i32_0 : i32, i32
  }
  func.func @transform_3(%arg0: i32, %arg1: i32) -> (i32, i32) {
    %c0_i32 = arith.constant 0 : i32
    %c0_i32_0 = arith.constant 0 : i32
    %c0_i32_1 = arith.constant 0 : i32
    return %c0_i32, %c0_i32_0 : i32, i32
  }
  func.func @transform_4(%arg0: i32, %arg1: i32) -> (i32, i32, i32) {
    %c0_i32 = arith.constant 0 : i32
    %c0_i32_0 = arith.constant 0 : i32
    %c0_i32_1 = arith.constant 0 : i32
    return %arg1, %c0_i32, %c0_i32_0 : i32, i32, i32
  }
  func.func @transform_5(%arg0: i32, %arg1: i32) -> (i32, i32, i32) {
    %c0_i32 = arith.constant 0 : i32
    %c0_i32_0 = arith.constant 0 : i32
    %c0_i32_1 = arith.constant 0 : i32
    return %arg0, %c0_i32, %c0_i32_0 : i32, i32, i32
  }
  func.func @transform_6(%arg0: i32, %arg1: i32) -> (i32, i32, i32) {
    %c0_i32 = arith.constant 0 : i32
    %c0_i32_0 = arith.constant 0 : i32
    %c0_i32_1 = arith.constant 0 : i32
    return %arg0, %c0_i32, %c0_i32_0 : i32, i32, i32
  }
  func.func @transform_7(%arg0: i32, %arg1: i32) -> (i32, i32, i32) {
    %c0_i32 = arith.constant 0 : i32
    %c0_i32_0 = arith.constant 0 : i32
    %c0_i32_1 = arith.constant 0 : i32
    return %arg0, %c0_i32, %c0_i32_0 : i32, i32, i32
  }
  func.func @transform_8(%arg0: i32, %arg1: i32) -> (i32, i32, i32) {
    %c0_i32 = arith.constant 0 : i32
    %c0_i32_0 = arith.constant 0 : i32
    %c0_i32_1 = arith.constant 0 : i32
    return %arg0, %c0_i32, %c0_i32_0 : i32, i32, i32
  }
  func.func @transform_9(%arg0: i32, %arg1: i32) -> (i32, i32, i32) {
    %c0_i32 = arith.constant 0 : i32
    %c0_i32_0 = arith.constant 0 : i32
    %c0_i32_1 = arith.constant 0 : i32
    return %arg0, %c0_i32, %c0_i32_0 : i32, i32, i32
  }
  func.func @transform_10(%arg0: i32, %arg1: i32) -> (i32, i32, i32) {
    %c0_i32 = arith.constant 0 : i32
    %c0_i32_0 = arith.constant 0 : i32
    %c0_i32_1 = arith.constant 0 : i32
    return %arg0, %c0_i32, %c0_i32_0 : i32, i32, i32
  }
  func.func @transform_11(%arg0: i32, %arg1: i32) -> (i32, i32, i32) {
    %c0_i32 = arith.constant 0 : i32
    %c0_i32_0 = arith.constant 0 : i32
    %c0_i32_1 = arith.constant 0 : i32
    return %arg0, %c0_i32, %c0_i32_0 : i32, i32, i32
  }
  func.func @transform_12(%arg0: i32, %arg1: i32) -> (i32, i32, i32) {
    %c0_i32 = arith.constant 0 : i32
    %c0_i32_0 = arith.constant 0 : i32
    %c0_i32_1 = arith.constant 0 : i32
    return %arg0, %c0_i32, %c0_i32_0 : i32, i32, i32
  }
  func.func @transform_13(%arg0: i32, %arg1: i32) -> (i32, i32, i32) {
    %c0_i32 = arith.constant 0 : i32
    %c0_i32_0 = arith.constant 0 : i32
    %c0_i32_1 = arith.constant 0 : i32
    return %arg0, %c0_i32, %c0_i32_0 : i32, i32, i32
  }
  func.func @transform_14(%arg0: i32, %arg1: i32) -> (i32, i32, i32) {
    %c0_i32 = arith.constant 0 : i32
    %c0_i32_0 = arith.constant 0 : i32
    %c0_i32_1 = arith.constant 0 : i32
    return %arg0, %c0_i32, %c0_i32_0 : i32, i32, i32
  }
  func.func @transform_15(%arg0: i32, %arg1: i32) -> (i32, i32, i32) {
    %c0_i32 = arith.constant 0 : i32
    %c0_i32_0 = arith.constant 0 : i32
    %c0_i32_1 = arith.constant 0 : i32
    return %arg0, %c0_i32, %c0_i32_0 : i32, i32, i32
  }
  func.func @transform_16(%arg0: i32, %arg1: i32) -> (i32, i32, i32) {
    %c0_i32 = arith.constant 0 : i32
    %c0_i32_0 = arith.constant 0 : i32
    %c0_i32_1 = arith.constant 0 : i32
    return %arg0, %c0_i32, %c0_i32_0 : i32, i32, i32
  }
  func.func @transform_17(%arg0: i32, %arg1: i32) -> (i32, i32, i32, i32) {
    %c0_i32 = arith.constant 0 : i32
    %c0_i32_0 = arith.constant 0 : i32
    %c0_i32_1 = arith.constant 0 : i32
    return %arg0, %arg1, %c0_i32, %c0_i32_0 : i32, i32, i32, i32
  }
}

</mosaic_0001>

<llo_original>
// kernel: tpu_custom_call.1
$region0: #{tpu_custom_call.1}
  #allocation0 [shape = 'u32[]', space=smem, size = 0x4, offset = 0x4, fixed_abs, tag = 'smem constant byte address 0x4 - core index']
  #allocation1 [shape = 'u32[144,128]{1,0:T(1,128)}', space=vmem, size = 0x12000, scoped, tag = 'internal scratch']
  #allocation2 [shape = 'bf16[2,8,32]{2,1,0:T(8,128)(2,1)}', space=vmem, size = 0x1000, scoped, tag = 'scratch operand']
  #allocation3 [shape = 'bf16[1,8,32]{2,1,0:T(8,128)(2,1)}', space=vmem, size = 0x800, scoped, tag = 'scratch operand']
  %s0 = inlined_call_operand.hbm [shape: f32[2,8,32], index: 0, kind: input, shape index: {}]
  %s1 = inlined_call_operand.hbm [shape: f32[8,32], index: 1, kind: input, shape index: {}]
  %s2 = inlined_call_operand.hbm [shape: f32[1,32], index: 2, kind: input, shape index: {}]
  %s3 = inlined_call_operand.hbm [shape: f32[1,32], index: 3, kind: input, shape index: {}]
  %s4 = inlined_call_operand.hbm [shape: f32[2,1,8], index: 4, kind: input, shape index: {}]
  %s5 = inlined_call_operand.hbm [shape: bf16[2,32,96], index: 5, kind: input, shape index: {}]
  %s6 = inlined_call_operand.hbm [shape: f32[2,1,96], index: 6, kind: input, shape index: {}]
  %s7 = inlined_call_operand.hbm [shape: bf16[2,32,32], index: 7, kind: input, shape index: {}]
  %s8 = inlined_call_operand.hbm [shape: f32[2,1,32], index: 8, kind: input, shape index: {}]
  %s9 = inlined_call_operand.hbm [shape: f32[2,1,32], index: 9, kind: input, shape index: {}]
  %s10 = inlined_call_operand.hbm [shape: f32[2,1,32], index: 10, kind: input, shape index: {}]
  %s11 = inlined_call_operand.hbm [shape: bf16[2,32,64], index: 11, kind: input, shape index: {}]
  %s12 = inlined_call_operand.hbm [shape: f32[2,1,64], index: 12, kind: input, shape index: {}]
  %s13 = inlined_call_operand.hbm [shape: bf16[2,64,32], index: 13, kind: input, shape index: {}]
  %s14 = inlined_call_operand.hbm [shape: f32[2,1,32], index: 14, kind: input, shape index: {}]
  %s15 = inlined_call_operand.hbm [shape: f32[2,1,32], index: 15, kind: input, shape index: {}]
  %s16 = inlined_call_operand.hbm [shape: f32[2,1,32], index: 16, kind: input, shape index: {}]
  %s17 = inlined_call_operand.hbm [shape: bf16[2,2,8,32], index: 17, kind: output, shape index: {}]
  %s18 = sld [smem:[#allocation0]]
  $region173: #{tpu_custom_call.1} parent=0
    _
  %s20 = ssub.s32 1, %s18
  %s21 = scalar_select 0, %s20, %s18
  $region1: #{tpu_custom_call.1} parent=0
    #allocation4 [shape = 'u8[8192]{0}', space=vmem, size = 0x2000, scoped, tag = 'input window, operand 0']
    #allocation5 [shape = 's32[2]{0}', space=sflag, size = 0x8, scoped, tag = 'scoped memory for tpu_custom_call.1']
    #allocation6 [shape = 's32[2]{0}', space=sflag, size = 0x8, scoped, tag = 'scoped memory for tpu_custom_call.1']
    #allocation7 [shape = 'u8[4096]{0}', space=vmem, size = 0x1000, scoped, tag = 'input window, operand 1, single buffered']
    #allocation8 [shape = 's32[1]{0}', space=sflag, size = 0x4, scoped, tag = 'scoped memory for tpu_custom_call.1']
    #allocation9 [shape = 'u8[512]{0}', space=vmem, size = 0x400, scoped, tag = 'input window, operand 2, single buffered']
    #allocation10 [shape = 'u8[512]{0}', space=vmem, size = 0x400, scoped, tag = 'input window, operand 3, single buffered']
    #allocation11 [shape = 's32[1]{0}', space=sflag, size = 0x4, scoped, tag = 'scoped memory for tpu_custom_call.1']
    #allocation12 [shape = 'u8[1024]{0}', space=vmem, size = 0x400, scoped, tag = 'input window, operand 4']
    #allocation13 [shape = 'u8[16384]{0}', space=vmem, size = 0x4000, scoped, tag = 'input window, operand 5']
    #allocation14 [shape = 'u8[1024]{0}', space=vmem, size = 0x400, scoped, tag = 'input window, operand 6']
    #allocation15 [shape = 'u8[16384]{0}', space=vmem, size = 0x4000, scoped, tag = 'input window, operand 7']
    #allocation16 [shape = 'u8[1024]{0}', space=vmem, size = 0x400, scoped, tag = 'input window, operand 8']
    #allocation17 [shape = 'u8[1024]{0}', space=vmem, size = 0x400, scoped, tag = 'input window, operand 9']
    #allocation18 [shape = 'u8[1024]{0}', space=vmem, size = 0x400, scoped, tag = 'input window, operand 10']
    #allocation19 [shape = 'u8[16384]{0}', space=vmem, size = 0x4000, scoped, tag = 'input window, operand 11']
    #allocation20 [shape = 'u8[1024]{0}', space=vmem, size = 0x400, scoped, tag = 'input window, operand 12']
    #allocation21 [shape = 'u8[32768]{0}', space=vmem, size = 0x8000, scoped, tag = 'input window, operand 13']
    #allocation22 [shape = 'u8[1024]{0}', space=vmem, size = 0x400, scoped, tag = 'input window, operand 14']
    #allocation23 [shape = 'u8[1024]{0}', space=vmem, size = 0x400, scoped, tag = 'input window, operand 15']
    #allocation24 [shape = 'u8[1024]{0}', space=vmem, size = 0x400, scoped, tag = 'input window, operand 16']
    #allocation25 [shape = 'u8[4096]{0}', space=vmem, size = 0x1000, scoped, tag = 'output window, operand 0']
    %22 = vsyncpa [#allocation5], 0
    %s23 = scalar_lea.sflag [#allocation5], 1
    %24 = vsyncpa %s23, 0
    %25 = vsyncpa [#allocation8], 0
    %26 = vsyncpa [#allocation11], 0
    %27 = vsyncpa [#allocation6], 0
    %s28 = scalar_lea.sflag [#allocation6], 1
    %29 = vsyncpa %s28, 0
    loop: start=0, step=1, limit=6
    $region2: #{tpu_custom_call.1} parent=1 // loop_pre_header
      _
    $region3: #{tpu_custom_call.1} parent=1 // loop_header
      %s31 = sphi 0, %s35
      %p32 = scmp.ge.s32.totalorder %s31, 6
      %s38 = sphi 0, %s50
      %s39 = sphi 0, %s46
      %s40 = sphi 0, %s38
      %s41 = sphi 0, %s39
      %s42 = sphi 0, %s40
      %s43 = sphi 0, %s41
      %s53 = sphi 0, %s55
      %s56 = sphi 0, %s53
      %s57 = sphi 0, %s56
      %s73 = sphi 0, %s57
      %s77 = sphi 0, %s77
      %s79 = sphi 0, %s77
      %s80 = sphi 0, %s79
      %s94 = sphi 0, %s80
      %s98 = sphi 0, %s98
      %s100 = sphi 0, %s98
      %s101 = sphi 0, %s100
      %s115 = sphi 0, %s101
      %s119 = sphi 0, %s119
      %s121 = sphi 0, %s119
      %s122 = sphi 0, %s121
      %s136 = sphi 0, %s122
      %s142 = sphi 0, %s144
      %s145 = sphi 0, %s142
      %s146 = sphi 0, %s145
      %s162 = sphi 0, %s146
      %s168 = sphi 0, %s170
      %s171 = sphi 0, %s168
      %s172 = sphi 0, %s171
      %s188 = sphi 0, %s172
      %s194 = sphi 0, %s196
      %s197 = sphi 0, %s194
      %s198 = sphi 0, %s197
      %s214 = sphi 0, %s198
      %s220 = sphi 0, %s222
      %s223 = sphi 0, %s220
      %s224 = sphi 0, %s223
      %s240 = sphi 0, %s224
      %s246 = sphi 0, %s248
      %s249 = sphi 0, %s246
      %s250 = sphi 0, %s249
      %s266 = sphi 0, %s250
      %s272 = sphi 0, %s274
      %s275 = sphi 0, %s272
      %s276 = sphi 0, %s275
      %s292 = sphi 0, %s276
      %s298 = sphi 0, %s300
      %s301 = sphi 0, %s298
      %s302 = sphi 0, %s301
      %s318 = sphi 0, %s302
      %s324 = sphi 0, %s326
      %s327 = sphi 0, %s324
      %s328 = sphi 0, %s327
      %s344 = sphi 0, %s328
      %s350 = sphi 0, %s352
      %s353 = sphi 0, %s350
      %s354 = sphi 0, %s353
      %s370 = sphi 0, %s354
      %s376 = sphi 0, %s378
      %s379 = sphi 0, %s376
      %s380 = sphi 0, %s379
      %s396 = sphi 0, %s380
      %s402 = sphi 0, %s404
      %s405 = sphi 0, %s402
      %s406 = sphi 0, %s405
      %s422 = sphi 0, %s406
      %s428 = sphi 0, %s430
      %s431 = sphi 0, %s428
      %s432 = sphi 0, %s431
      %s448 = sphi 0, %s432
      %s454 = sphi 0, %s456
      %s457 = sphi 0, %s454
      %s458 = sphi 0, %s457
      %s474 = sphi 0, %s458
      %s482 = sphi 0, %s484
      %s485 = sphi 0, %s482
      %s486 = sphi 0, %s485
      %s502 = sphi 0, %s486
    $region4: #{tpu_custom_call.1} parent=1 // loop_header_branch
      %34 = sbr.rel (%p32) target = $region8
    $region5: #{tpu_custom_call.1} parent=1 // loop_body
      %s36 = ssub.s32 %s31, 1
      %s37 = ssub.s32 %s31, 2
      %s44 = sadd.s32 1, %s39
      %p45 = scmp.ge.s32.totalorder %s44, 2
      %s46 = scalar_select %p45, 0, %s44
      %s47 = sadd.s32 1, %s38
      %s48 = scalar_select %p45, %s47, %s38
      %p49 = scmp.ge.s32.totalorder %s48, 2
      %s50 = scalar_select %p49, 0, %s48
      %s51 = ssub.s32 %s39, %s46
      %p52 = scmp.eq.s32.totalorder %s51, 0
      %s54 = sadd.s32 %s53, 1
      %s55 = scalar_select %p52, %s53, %s54
      %p58 = pneg %p52
      %p59 = scmp.eq.s32.totalorder %s31, 3
      %p60 = por %p58, %p59
      %p61 = scmp.ne.s32.totalorder %s53, %s56
      %p62 = scmp.eq.s32.totalorder %s31, 0
      %p63 = por %p61, %p62
      %p64 = scmp.ne.s32.totalorder %s53, %s56
      %p65 = scmp.eq.s32.totalorder %s36, 3
      %p66 = por %p64, %p65
      %p67 = scmp.ne.s32.totalorder %s56, %s57
      %p68 = scmp.eq.s32.totalorder %s36, 0
      %p69 = por %p67, %p68
      %p70 = scmp.ne.s32.totalorder %s56, %s57
      %p71 = scmp.eq.s32.totalorder %s37, 3
      %p72 = por %p70, %p71
      %p74 = scmp.ne.s32.totalorder %s57, %s73
      %p75 = scmp.eq.s32.totalorder %s37, 0
      %p76 = por %p74, %p75
      %s78 = sadd.s32 %s77, 1
      %p81 = scmp.eq.s32.totalorder %s31, 3
      %p82 = scmp.ne.s32.totalorder %s77, %s79
      %p83 = scmp.eq.s32.totalorder %s31, 0
      %p84 = por %p82, %p83
      %p85 = scmp.ne.s32.totalorder %s77, %s79
      %p86 = scmp.eq.s32.totalorder %s36, 3
      %p87 = por %p85, %p86
      %p88 = scmp.ne.s32.totalorder %s79, %s80
      %p89 = scmp.eq.s32.totalorder %s36, 0
      %p90 = por %p88, %p89
      %p91 = scmp.ne.s32.totalorder %s79, %s80
      %p92 = scmp.eq.s32.totalorder %s37, 3
      %p93 = por %p91, %p92
      %p95 = scmp.ne.s32.totalorder %s80, %s94
      %p96 = scmp.eq.s32.totalorder %s37, 0
      %p97 = por %p95, %p96
      %s99 = sadd.s32 %s98, 1
      %p102 = scmp.eq.s32.totalorder %s31, 3
      %p103 = scmp.ne.s32.totalorder %s98, %s100
      %p104 = scmp.eq.s32.totalorder %s31, 0
      %p105 = por %p103, %p104
      %p106 = scmp.ne.s32.totalorder %s98, %s100
      %p107 = scmp.eq.s32.totalorder %s36, 3
      %p108 = por %p106, %p107
      %p109 = scmp.ne.s32.totalorder %s100, %s101
      %p110 = scmp.eq.s32.totalorder %s36, 0
      %p111 = por %p109, %p110
      %p112 = scmp.ne.s32.totalorder %s100, %s101
      %p113 = scmp.eq.s32.totalorder %s37, 3
      %p114 = por %p112, %p113
      %p116 = scmp.ne.s32.totalorder %s101, %s115
      %p117 = scmp.eq.s32.totalorder %s37, 0
      %p118 = por %p116, %p117
      %s120 = sadd.s32 %s119, 1
      %p123 = scmp.eq.s32.totalorder %s31, 3
      %p124 = scmp.ne.s32.totalorder %s119, %s121
      %p125 = scmp.eq.s32.totalorder %s31, 0
      %p126 = por %p124, %p125
      %p127 = scmp.ne.s32.totalorder %s119, %s121
      %p128 = scmp.eq.s32.totalorder %s36, 3
      %p129 = por %p127, %p128
      %p130 = scmp.ne.s32.totalorder %s121, %s122
      %p131 = scmp.eq.s32.totalorder %s36, 0
      %p132 = por %p130, %p131
      %p133 = scmp.ne.s32.totalorder %s121, %s122
      %p134 = scmp.eq.s32.totalorder %s37, 3
      %p135 = por %p133, %p134
      %p137 = scmp.ne.s32.totalorder %s122, %s136
      %p138 = scmp.eq.s32.totalorder %s37, 0
      %p139 = por %p137, %p138
      %s140 = ssub.s32 %s39, %s46
      %p141 = scmp.eq.s32.totalorder %s140, 0
      %s143 = sadd.s32 %s142, 1
      %s144 = scalar_select %p141, %s142, %s143
      %p147 = pneg %p141
      %p148 = scmp.eq.s32.totalorder %s31, 3
      %p149 = por %p147, %p148
      %p150 = scmp.ne.s32.totalorder %s142, %s145
      %p151 = scmp.eq.s32.totalorder %s31, 0
      %p152 = por %p150, %p151
      %p153 = scmp.ne.s32.totalorder %s142, %s145
      %p154 = scmp.eq.s32.totalorder %s36, 3
      %p155 = por %p153, %p154
      %p156 = scmp.ne.s32.totalorder %s145, %s146
      %p157 = scmp.eq.s32.totalorder %s36, 0
      %p158 = por %p156, %p157
      %p159 = scmp.ne.s32.totalorder %s145, %s146
      %p160 = scmp.eq.s32.totalorder %s37, 3
      %p161 = por %p159, %p160
      %p163 = scmp.ne.s32.totalorder %s146, %s162
      %p164 = scmp.eq.s32.totalorder %s37, 0
      %p165 = por %p163, %p164
      %s166 = ssub.s32 %s38, %s50
      %p167 = scmp.eq.s32.totalorder %s166, 0
      %s169 = sadd.s32 %s168, 1
      %s170 = scalar_select %p167, %s168, %s169
      %p173 = pneg %p167
      %p174 = scmp.eq.s32.totalorder %s31, 3
      %p175 = por %p173, %p174
      %p176 = scmp.ne.s32.totalorder %s168, %s171
      %p177 = scmp.eq.s32.totalorder %s31, 0
      %p178 = por %p176, %p177
      %p179 = scmp.ne.s32.totalorder %s168, %s171
      %p180 = scmp.eq.s32.totalorder %s36, 3
      %p181 = por %p179, %p180
      %p182 = scmp.ne.s32.totalorder %s171, %s172
      %p183 = scmp.eq.s32.totalorder %s36, 0
      %p184 = por %p182, %p183
      %p185 = scmp.ne.s32.totalorder %s171, %s172
      %p186 = scmp.eq.s32.totalorder %s37, 3
      %p187 = por %p185, %p186
      %p189 = scmp.ne.s32.totalorder %s172, %s188
      %p190 = scmp.eq.s32.totalorder %s37, 0
      %p191 = por %p189, %p190
      %s192 = ssub.s32 %s38, %s50
      %p193 = scmp.eq.s32.totalorder %s192, 0
      %s195 = sadd.s32 %s194, 1
      %s196 = scalar_select %p193, %s194, %s195
      %p199 = pneg %p193
      %p200 = scmp.eq.s32.totalorder %s31, 3
      %p201 = por %p199, %p200
      %p202 = scmp.ne.s32.totalorder %s194, %s197
      %p203 = scmp.eq.s32.totalorder %s31, 0
      %p204 = por %p202, %p203
      %p205 = scmp.ne.s32.totalorder %s194, %s197
      %p206 = scmp.eq.s32.totalorder %s36, 3
      %p207 = por %p205, %p206
      %p208 = scmp.ne.s32.totalorder %s197, %s198
      %p209 = scmp.eq.s32.totalorder %s36, 0
      %p210 = por %p208, %p209
      %p211 = scmp.ne.s32.totalorder %s197, %s198
      %p212 = scmp.eq.s32.totalorder %s37, 3
      %p213 = por %p211, %p212
      %p215 = scmp.ne.s32.totalorder %s198, %s214
      %p216 = scmp.eq.s32.totalorder %s37, 0
      %p217 = por %p215, %p216
      %s218 = ssub.s32 %s38, %s50
      %p219 = scmp.eq.s32.totalorder %s218, 0
      %s221 = sadd.s32 %s220, 1
      %s222 = scalar_select %p219, %s220, %s221
      %p225 = pneg %p219
      %p226 = scmp.eq.s32.totalorder %s31, 3
      %p227 = por %p225, %p226
      %p228 = scmp.ne.s32.totalorder %s220, %s223
      %p229 = scmp.eq.s32.totalorder %s31, 0
      %p230 = por %p228, %p229
      %p231 = scmp.ne.s32.totalorder %s220, %s223
      %p232 = scmp.eq.s32.totalorder %s36, 3
      %p233 = por %p231, %p232
      %p234 = scmp.ne.s32.totalorder %s223, %s224
      %p235 = scmp.eq.s32.totalorder %s36, 0
      %p236 = por %p234, %p235
      %p237 = scmp.ne.s32.totalorder %s223, %s224
      %p238 = scmp.eq.s32.totalorder %s37, 3
      %p239 = por %p237, %p238
      %p241 = scmp.ne.s32.totalorder %s224, %s240
      %p242 = scmp.eq.s32.totalorder %s37, 0
      %p243 = por %p241, %p242
      %s244 = ssub.s32 %s38, %s50
      %p245 = scmp.eq.s32.totalorder %s244, 0
      %s247 = sadd.s32 %s246, 1
      %s248 = scalar_select %p245, %s246, %s247
      %p251 = pneg %p245
      %p252 = scmp.eq.s32.totalorder %s31, 3
      %p253 = por %p251, %p252
      %p254 = scmp.ne.s32.totalorder %s246, %s249
      %p255 = scmp.eq.s32.totalorder %s31, 0
      %p256 = por %p254, %p255
      %p257 = scmp.ne.s32.totalorder %s246, %s249
      %p258 = scmp.eq.s32.totalorder %s36, 3
      %p259 = por %p257, %p258
      %p260 = scmp.ne.s32.totalorder %s249, %s250
      %p261 = scmp.eq.s32.totalorder %s36, 0
      %p262 = por %p260, %p261
      %p263 = scmp.ne.s32.totalorder %s249, %s250
      %p264 = scmp.eq.s32.totalorder %s37, 3
      %p265 = por %p263, %p264
      %p267 = scmp.ne.s32.totalorder %s250, %s266
      %p268 = scmp.eq.s32.totalorder %s37, 0
      %p269 = por %p267, %p268
      %s270 = ssub.s32 %s38, %s50
      %p271 = scmp.eq.s32.totalorder %s270, 0
      %s273 = sadd.s32 %s272, 1
      %s274 = scalar_select %p271, %s272, %s273
      %p277 = pneg %p271
      %p278 = scmp.eq.s32.totalorder %s31, 3
      %p279 = por %p277, %p278
      %p280 = scmp.ne.s32.totalorder %s272, %s275
      %p281 = scmp.eq.s32.totalorder %s31, 0
      %p282 = por %p280, %p281
      %p283 = scmp.ne.s32.totalorder %s272, %s275
      %p284 = scmp.eq.s32.totalorder %s36, 3
      %p285 = por %p283, %p284
      %p286 = scmp.ne.s32.totalorder %s275, %s276
      %p287 = scmp.eq.s32.totalorder %s36, 0
      %p288 = por %p286, %p287
      %p289 = scmp.ne.s32.totalorder %s275, %s276
      %p290 = scmp.eq.s32.totalorder %s37, 3
      %p291 = por %p289, %p290
      %p293 = scmp.ne.s32.totalorder %s276, %s292
      %p294 = scmp.eq.s32.totalorder %s37, 0
      %p295 = por %p293, %p294
      %s296 = ssub.s32 %s38, %s50
      %p297 = scmp.eq.s32.totalorder %s296, 0
      %s299 = sadd.s32 %s298, 1
      %s300 = scalar_select %p297, %s298, %s299
      %p303 = pneg %p297
      %p304 = scmp.eq.s32.totalorder %s31, 3
      %p305 = por %p303, %p304
      %p306 = scmp.ne.s32.totalorder %s298, %s301
      %p307 = scmp.eq.s32.totalorder %s31, 0
      %p308 = por %p306, %p307
      %p309 = scmp.ne.s32.totalorder %s298, %s301
      %p310 = scmp.eq.s32.totalorder %s36, 3
      %p311 = por %p309, %p310
      %p312 = scmp.ne.s32.totalorder %s301, %s302
      %p313 = scmp.eq.s32.totalorder %s36, 0
      %p314 = por %p312, %p313
      %p315 = scmp.ne.s32.totalorder %s301, %s302
      %p316 = scmp.eq.s32.totalorder %s37, 3
      %p317 = por %p315, %p316
      %p319 = scmp.ne.s32.totalorder %s302, %s318
      %p320 = scmp.eq.s32.totalorder %s37, 0
      %p321 = por %p319, %p320
      %s322 = ssub.s32 %s38, %s50
      %p323 = scmp.eq.s32.totalorder %s322, 0
      %s325 = sadd.s32 %s324, 1
      %s326 = scalar_select %p323, %s324, %s325
      %p329 = pneg %p323
      %p330 = scmp.eq.s32.totalorder %s31, 3
      %p331 = por %p329, %p330
      %p332 = scmp.ne.s32.totalorder %s324, %s327
      %p333 = scmp.eq.s32.totalorder %s31, 0
      %p334 = por %p332, %p333
      %p335 = scmp.ne.s32.totalorder %s324, %s327
      %p336 = scmp.eq.s32.totalorder %s36, 3
      %p337 = por %p335, %p336
      %p338 = scmp.ne.s32.totalorder %s327, %s328
      %p339 = scmp.eq.s32.totalorder %s36, 0
      %p340 = por %p338, %p339
      %p341 = scmp.ne.s32.totalorder %s327, %s328
      %p342 = scmp.eq.s32.totalorder %s37, 3
      %p343 = por %p341, %p342
      %p345 = scmp.ne.s32.totalorder %s328, %s344
      %p346 = scmp.eq.s32.totalorder %s37, 0
      %p347 = por %p345, %p346
      %s348 = ssub.s32 %s38, %s50
      %p349 = scmp.eq.s32.totalorder %s348, 0
      %s351 = sadd.s32 %s350, 1
      %s352 = scalar_select %p349, %s350, %s351
      %p355 = pneg %p349
      %p356 = scmp.eq.s32.totalorder %s31, 3
      %p357 = por %p355, %p356
      %p358 = scmp.ne.s32.totalorder %s350, %s353
      %p359 = scmp.eq.s32.totalorder %s31, 0
      %p360 = por %p358, %p359
      %p361 = scmp.ne.s32.totalorder %s350, %s353
      %p362 = scmp.eq.s32.totalorder %s36, 3
      %p363 = por %p361, %p362
      %p364 = scmp.ne.s32.totalorder %s353, %s354
      %p365 = scmp.eq.s32.totalorder %s36, 0
      %p366 = por %p364, %p365
      %p367 = scmp.ne.s32.totalorder %s353, %s354
      %p368 = scmp.eq.s32.totalorder %s37, 3
      %p369 = por %p367, %p368
      %p371 = scmp.ne.s32.totalorder %s354, %s370
      %p372 = scmp.eq.s32.totalorder %s37, 0
      %p373 = por %p371, %p372
      %s374 = ssub.s32 %s38, %s50
      %p375 = scmp.eq.s32.totalorder %s374, 0
      %s377 = sadd.s32 %s376, 1
      %s378 = scalar_select %p375, %s376, %s377
      %p381 = pneg %p375
      %p382 = scmp.eq.s32.totalorder %s31, 3
      %p383 = por %p381, %p382
      %p384 = scmp.ne.s32.totalorder %s376, %s379
      %p385 = scmp.eq.s32.totalorder %s31, 0
      %p386 = por %p384, %p385
      %p387 = scmp.ne.s32.totalorder %s376, %s379
      %p388 = scmp.eq.s32.totalorder %s36, 3
      %p389 = por %p387, %p388
      %p390 = scmp.ne.s32.totalorder %s379, %s380
      %p391 = scmp.eq.s32.totalorder %s36, 0
      %p392 = por %p390, %p391
      %p393 = scmp.ne.s32.totalorder %s379, %s380
      %p394 = scmp.eq.s32.totalorder %s37, 3
      %p395 = por %p393, %p394
      %p397 = scmp.ne.s32.totalorder %s380, %s396
      %p398 = scmp.eq.s32.totalorder %s37, 0
      %p399 = por %p397, %p398
      %s400 = ssub.s32 %s38, %s50
      %p401 = scmp.eq.s32.totalorder %s400, 0
      %s403 = sadd.s32 %s402, 1
      %s404 = scalar_select %p401, %s402, %s403
      %p407 = pneg %p401
      %p408 = scmp.eq.s32.totalorder %s31, 3
      %p409 = por %p407, %p408
      %p410 = scmp.ne.s32.totalorder %s402, %s405
      %p411 = scmp.eq.s32.totalorder %s31, 0
      %p412 = por %p410, %p411
      %p413 = scmp.ne.s32.totalorder %s402, %s405
      %p414 = scmp.eq.s32.totalorder %s36, 3
      %p415 = por %p413, %p414
      %p416 = scmp.ne.s32.totalorder %s405, %s406
      %p417 = scmp.eq.s32.totalorder %s36, 0
      %p418 = por %p416, %p417
      %p419 = scmp.ne.s32.totalorder %s405, %s406
      %p420 = scmp.eq.s32.totalorder %s37, 3
      %p421 = por %p419, %p420
      %p423 = scmp.ne.s32.totalorder %s406, %s422
      %p424 = scmp.eq.s32.totalorder %s37, 0
      %p425 = por %p423, %p424
      %s426 = ssub.s32 %s38, %s50
      %p427 = scmp.eq.s32.totalorder %s426, 0
      %s429 = sadd.s32 %s428, 1
      %s430 = scalar_select %p427, %s428, %s429
      %p433 = pneg %p427
      %p434 = scmp.eq.s32.totalorder %s31, 3
      %p435 = por %p433, %p434
      %p436 = scmp.ne.s32.totalorder %s428, %s431
      %p437 = scmp.eq.s32.totalorder %s31, 0
      %p438 = por %p436, %p437
      %p439 = scmp.ne.s32.totalorder %s428, %s431
      %p440 = scmp.eq.s32.totalorder %s36, 3
      %p441 = por %p439, %p440
      %p442 = scmp.ne.s32.totalorder %s431, %s432
      %p443 = scmp.eq.s32.totalorder %s36, 0
      %p444 = por %p442, %p443
      %p445 = scmp.ne.s32.totalorder %s431, %s432
      %p446 = scmp.eq.s32.totalorder %s37, 3
      %p447 = por %p445, %p446
      %p449 = scmp.ne.s32.totalorder %s432, %s448
      %p450 = scmp.eq.s32.totalorder %s37, 0
      %p451 = por %p449, %p450
      %s452 = ssub.s32 %s38, %s50
      %p453 = scmp.eq.s32.totalorder %s452, 0
      %s455 = sadd.s32 %s454, 1
      %s456 = scalar_select %p453, %s454, %s455
      %p459 = pneg %p453
      %p460 = scmp.eq.s32.totalorder %s31, 3
      %p461 = por %p459, %p460
      %p462 = scmp.ne.s32.totalorder %s454, %s457
      %p463 = scmp.eq.s32.totalorder %s31, 0
      %p464 = por %p462, %p463
      %p465 = scmp.ne.s32.totalorder %s454, %s457
      %p466 = scmp.eq.s32.totalorder %s36, 3
      %p467 = por %p465, %p466
      %p468 = scmp.ne.s32.totalorder %s457, %s458
      %p469 = scmp.eq.s32.totalorder %s36, 0
      %p470 = por %p468, %p469
      %p471 = scmp.ne.s32.totalorder %s457, %s458
      %p472 = scmp.eq.s32.totalorder %s37, 3
      %p473 = por %p471, %p472
      %p475 = scmp.ne.s32.totalorder %s458, %s474
      %p476 = scmp.eq.s32.totalorder %s37, 0
      %p477 = por %p475, %p476
      %s478 = ssub.s32 %s38, %s50
      %s479 = ssub.s32 %s39, %s46
      %s480 = sor.u32 %s478, %s479
      %p481 = scmp.eq.s32.totalorder %s480, 0
      %s483 = sadd.s32 %s482, 1
      %s484 = scalar_select %p481, %s482, %s483
      %p487 = pneg %p481
      %p488 = scmp.eq.s32.totalorder %s31, 3
      %p489 = por %p487, %p488
      %p490 = scmp.ne.s32.totalorder %s482, %s485
      %p491 = scmp.eq.s32.totalorder %s31, 0
      %p492 = por %p490, %p491
      %p493 = scmp.ne.s32.totalorder %s482, %s485
      %p494 = scmp.eq.s32.totalorder %s36, 3
      %p495 = por %p493, %p494
      %p496 = scmp.ne.s32.totalorder %s485, %s486
      %p497 = scmp.eq.s32.totalorder %s36, 0
      %p498 = por %p496, %p497
      %p499 = scmp.ne.s32.totalorder %s485, %s486
      %p500 = scmp.eq.s32.totalorder %s37, 3
      %p501 = por %p499, %p500
      %p503 = scmp.ne.s32.totalorder %s486, %s502
      %p504 = scmp.eq.s32.totalorder %s37, 0
      %p505 = por %p503, %p504
      %p506 = scmp.le.s32.totalorder 1, %s31
      %p507 = scmp.lt.s32.totalorder %s31, 5
      %p508 = pnand %p506, %p507
      %p509 = pneg %p508
      // Predicated region
      $region9: #{tpu_custom_call.1} parent=5 // pred_check
        _
      $region10: #{tpu_custom_call.1} parent=5 // pred_check_branch
        %511 = sbr.rel (%p508) target = $region12
      $region11: #{tpu_custom_call.1} parent=5 // pred_region
        %s512 = ssub.s32 %s31, 1
        // Predicated region
        $region13: #{tpu_custom_call.1} parent=11 // pred_check
          %p513 = pneg %p90
        $region14: #{tpu_custom_call.1} parent=11 // pred_check_branch
          %515 = sbr.rel (%p513) target = $region16
        $region15: #{tpu_custom_call.1} parent=11 // pred_region
          %s517 = ssub.s32 128, 128
          %518 = vsyncadd [#allocation8], %s517
          %s520 = sshll.u32 [#allocation7], 4
          %s521 = int_to_ptr.vmem [resolvable:$true] %s520
          %523 = dma.hbm_to_vmem [thread:$0]  %s1, 128, %s521, [#allocation8]
        $region16: #{tpu_custom_call.1} parent=11 // pred_fallthru
          _
        // Predicated region
        $region17: #{tpu_custom_call.1} parent=11 // pred_check
          %p524 = pneg %p111
        $region18: #{tpu_custom_call.1} parent=11 // pred_check_branch
          %526 = sbr.rel (%p524) target = $region20
        $region19: #{tpu_custom_call.1} parent=11 // pred_region
          %s528 = ssub.s32 16, 16
          %529 = vsyncadd [#allocation8], %s528
          %s531 = sshll.u32 [#allocation9], 4
          %s532 = int_to_ptr.vmem [resolvable:$true] %s531
          %534 = dma.hbm_to_vmem [thread:$0]  %s2, 16, %s532, [#allocation8]
        $region20: #{tpu_custom_call.1} parent=11 // pred_fallthru
          _
        // Predicated region
        $region21: #{tpu_custom_call.1} parent=11 // pred_check
          %p535 = pneg %p132
        $region22: #{tpu_custom_call.1} parent=11 // pred_check_branch
          %537 = sbr.rel (%p535) target = $region24
        $region23: #{tpu_custom_call.1} parent=11 // pred_region
          %s539 = ssub.s32 16, 16
          %540 = vsyncadd [#allocation11], %s539
          %s542 = sshll.u32 [#allocation10], 4
          %s543 = int_to_ptr.vmem [resolvable:$true] %s542
          %545 = dma.hbm_to_vmem [thread:$0]  %s3, 16, %s543, [#allocation11]
        $region24: #{tpu_custom_call.1} parent=11 // pred_fallthru
          _
      $region12: #{tpu_custom_call.1} parent=5 // pred_fallthru
        _
      %p546 = scmp.lt.s32.totalorder %s31, 4
      // Predicated region
      $region25: #{tpu_custom_call.1} parent=5 // pred_check
        %p547 = pneg %p546
      $region26: #{tpu_custom_call.1} parent=5 // pred_check_branch
        %549 = sbr.rel (%p547) target = $region28
      $region27: #{tpu_custom_call.1} parent=5 // pred_region
        // Predicated region
        $region29: #{tpu_custom_call.1} parent=27 // pred_check
          %p550 = pneg %p63
        $region30: #{tpu_custom_call.1} parent=27 // pred_check_branch
          %552 = sbr.rel (%p550) target = $region32
        $region31: #{tpu_custom_call.1} parent=27 // pred_region
          %s553 = sand.u32 %s31, 1
          %s554 = scalar_lea.sflag [#allocation5], %s553
          %s555 = sand.u32 %s53, 1
          %s556 = smul.addr %s555, 8
          %s557 = scalar_lea.vmem [#allocation4], %s556
          %s559 = ssub.s32 128, 128
          %560 = vsyncadd %s554, %s559
          %s561 = smul.addr %s39, 128
          %s562 = scalar_lea.hbm %s0, %s561
          %s564 = sshll.u32 %s557, 4
          %s565 = int_to_ptr.vmem [resolvable:$true] %s564
          %567 = dma.hbm_to_vmem [thread:$0]  %s562, 128, %s565, %s554
        $region32: #{tpu_custom_call.1} parent=27 // pred_fallthru
          _
        // Predicated region
        $region33: #{tpu_custom_call.1} parent=27 // pred_check
          %p568 = pneg %p152
        $region34: #{tpu_custom_call.1} parent=27 // pred_check_branch
          %570 = sbr.rel (%p568) target = $region36
        $region35: #{tpu_custom_call.1} parent=27 // pred_region
          %s571 = sand.u32 %s31, 1
          %s572 = scalar_lea.sflag [#allocation5], %s571
          %s573 = sand.u32 %s142, 1
          %s574 = scalar_lea.vmem [#allocation12], %s573
          %s576 = ssub.s32 16, 16
          %577 = vsyncadd %s572, %s576
          %s578 = smul.addr %s39, 16
          %s579 = scalar_lea.hbm %s4, %s578
          %s581 = sshll.u32 %s574, 4
          %s582 = int_to_ptr.vmem [resolvable:$true] %s581
          %584 = dma.hbm_to_vmem [thread:$0]  %s579, 16, %s582, %s572
        $region36: #{tpu_custom_call.1} parent=27 // pred_fallthru
          _
        // Predicated region
        $region37: #{tpu_custom_call.1} parent=27 // pred_check
          %p585 = pneg %p178
        $region38: #{tpu_custom_call.1} parent=27 // pred_check_branch
          %587 = sbr.rel (%p585) target = $region40
        $region39: #{tpu_custom_call.1} parent=27 // pred_region
          %s588 = sand.u32 %s31, 1
          %s589 = scalar_lea.sflag [#allocation5], %s588
          %s590 = sand.u32 %s168, 1
          %s591 = smul.addr %s590, 16
          %s592 = scalar_lea.vmem [#allocation13], %s591
          %s594 = ssub.s32 256, 256
          %595 = vsyncadd %s589, %s594
          %s596 = smul.addr %s38, 4
          %s597 = smul.addr %s596, 64
          %s598 = scalar_lea.hbm %s5, %s597
          %s599 = sshll.u32 %s592, 4
          %s600 = int_to_ptr.vmem [resolvable:$true] %s599
          %605 = dma.hbm_to_vmem [thread:$0]  %s598, 256, %s600, %s589, 64, 64, 4
        $region40: #{tpu_custom_call.1} parent=27 // pred_fallthru
          _
        // Predicated region
        $region41: #{tpu_custom_call.1} parent=27 // pred_check
          %p606 = pneg %p204
        $region42: #{tpu_custom_call.1} parent=27 // pred_check_branch
          %608 = sbr.rel (%p606) target = $region44
        $region43: #{tpu_custom_call.1} parent=27 // pred_region
          %s609 = sand.u32 %s31, 1
          %s610 = scalar_lea.sflag [#allocation5], %s609
          %s611 = sand.u32 %s194, 1
          %s612 = scalar_lea.vmem [#allocation14], %s611
          %s614 = ssub.s32 16, 16
          %615 = vsyncadd %s610, %s614
          %s616 = smul.addr %s38, 16
          %s617 = scalar_lea.hbm %s6, %s616
          %s619 = sshll.u32 %s612, 4
          %s620 = int_to_ptr.vmem [resolvable:$true] %s619
          %622 = dma.hbm_to_vmem [thread:$0]  %s617, 16, %s620, %s610
        $region44: #{tpu_custom_call.1} parent=27 // pred_fallthru
          _
        // Predicated region
        $region45: #{tpu_custom_call.1} parent=27 // pred_check
          %p623 = pneg %p230
        $region46: #{tpu_custom_call.1} parent=27 // pred_check_branch
          %625 = sbr.rel (%p623) target = $region48
        $region47: #{tpu_custom_call.1} parent=27 // pred_region
          %s626 = sand.u32 %s31, 1
          %s627 = scalar_lea.sflag [#allocation5], %s626
          %s628 = sand.u32 %s220, 1
          %s629 = smul.addr %s628, 16
          %s630 = scalar_lea.vmem [#allocation15], %s629
          %s632 = ssub.s32 256, 256
          %633 = vsyncadd %s627, %s632
          %s634 = smul.addr %s38, 4
          %s635 = smul.addr %s634, 64
          %s636 = scalar_lea.hbm %s7, %s635
          %s637 = sshll.u32 %s630, 4
          %s638 = int_to_ptr.vmem [resolvable:$true] %s637
          %643 = dma.hbm_to_vmem [thread:$0]  %s636, 256, %s638, %s627, 64, 64, 4
        $region48: #{tpu_custom_call.1} parent=27 // pred_fallthru
          _
        // Predicated region
        $region49: #{tpu_custom_call.1} parent=27 // pred_check
          %p644 = pneg %p256
        $region50: #{tpu_custom_call.1} parent=27 // pred_check_branch
          %646 = sbr.rel (%p644) target = $region52
        $region51: #{tpu_custom_call.1} parent=27 // pred_region
          %s647 = sand.u32 %s31, 1
          %s648 = scalar_lea.sflag [#allocation5], %s647
          %s649 = sand.u32 %s246, 1
          %s650 = scalar_lea.vmem [#allocation16], %s649
          %s652 = ssub.s32 16, 16
          %653 = vsyncadd %s648, %s652
          %s654 = smul.addr %s38, 16
          %s655 = scalar_lea.hbm %s8, %s654
          %s657 = sshll.u32 %s650, 4
          %s658 = int_to_ptr.vmem [resolvable:$true] %s657
          %660 = dma.hbm_to_vmem [thread:$0]  %s655, 16, %s658, %s648
        $region52: #{tpu_custom_call.1} parent=27 // pred_fallthru
          _
        // Predicated region
        $region53: #{tpu_custom_call.1} parent=27 // pred_check
          %p661 = pneg %p282
        $region54: #{tpu_custom_call.1} parent=27 // pred_check_branch
          %663 = sbr.rel (%p661) target = $region56
        $region55: #{tpu_custom_call.1} parent=27 // pred_region
          %s664 = sand.u32 %s31, 1
          %s665 = scalar_lea.sflag [#allocation5], %s664
          %s666 = sand.u32 %s272, 1
          %s667 = scalar_lea.vmem [#allocation17], %s666
          %s669 = ssub.s32 16, 16
          %670 = vsyncadd %s665, %s669
          %s671 = smul.addr %s38, 16
          %s672 = scalar_lea.hbm %s9, %s671
          %s674 = sshll.u32 %s667, 4
          %s675 = int_to_ptr.vmem [resolvable:$true] %s674
          %677 = dma.hbm_to_vmem [thread:$0]  %s672, 16, %s675, %s665
        $region56: #{tpu_custom_call.1} parent=27 // pred_fallthru
          _
        // Predicated region
        $region57: #{tpu_custom_call.1} parent=27 // pred_check
          %p678 = pneg %p308
        $region58: #{tpu_custom_call.1} parent=27 // pred_check_branch
          %680 = sbr.rel (%p678) target = $region60
        $region59: #{tpu_custom_call.1} parent=27 // pred_region
          %s681 = sand.u32 %s31, 1
          %s682 = scalar_lea.sflag [#allocation5], %s681
          %s683 = sand.u32 %s298, 1
          %s684 = scalar_lea.vmem [#allocation18], %s683
          %s686 = ssub.s32 16, 16
          %687 = vsyncadd %s682, %s686
          %s688 = smul.addr %s38, 16
          %s689 = scalar_lea.hbm %s10, %s688
          %s691 = sshll.u32 %s684, 4
          %s692 = int_to_ptr.vmem [resolvable:$true] %s691
          %694 = dma.hbm_to_vmem [thread:$0]  %s689, 16, %s692, %s682
        $region60: #{tpu_custom_call.1} parent=27 // pred_fallthru
          _
        // Predicated region
        $region61: #{tpu_custom_call.1} parent=27 // pred_check
          %p695 = pneg %p334
        $region62: #{tpu_custom_call.1} parent=27 // pred_check_branch
          %697 = sbr.rel (%p695) target = $region64
        $region63: #{tpu_custom_call.1} parent=27 // pred_region
          %s698 = sand.u32 %s31, 1
          %s699 = scalar_lea.sflag [#allocation5], %s698
          %s700 = sand.u32 %s324, 1
          %s701 = smul.addr %s700, 16
          %s702 = scalar_lea.vmem [#allocation19], %s701
          %s704 = ssub.s32 256, 256
          %705 = vsyncadd %s699, %s704
          %s706 = smul.addr %s38, 4
          %s707 = smul.addr %s706, 64
          %s708 = scalar_lea.hbm %s11, %s707
          %s709 = sshll.u32 %s702, 4
          %s710 = int_to_ptr.vmem [resolvable:$true] %s709
          %715 = dma.hbm_to_vmem [thread:$0]  %s708, 256, %s710, %s699, 64, 64, 4
        $region64: #{tpu_custom_call.1} parent=27 // pred_fallthru
          _
        // Predicated region
        $region65: #{tpu_custom_call.1} parent=27 // pred_check
          %p716 = pneg %p360
        $region66: #{tpu_custom_call.1} parent=27 // pred_check_branch
          %718 = sbr.rel (%p716) target = $region68
        $region67: #{tpu_custom_call.1} parent=27 // pred_region
          %s719 = sand.u32 %s31, 1
          %s720 = scalar_lea.sflag [#allocation5], %s719
          %s721 = sand.u32 %s350, 1
          %s722 = scalar_lea.vmem [#allocation20], %s721
          %s724 = ssub.s32 16, 16
          %725 = vsyncadd %s720, %s724
          %s726 = smul.addr %s38, 16
          %s727 = scalar_lea.hbm %s12, %s726
          %s729 = sshll.u32 %s722, 4
          %s730 = int_to_ptr.vmem [resolvable:$true] %s729
          %732 = dma.hbm_to_vmem [thread:$0]  %s727, 16, %s730, %s720
        $region68: #{tpu_custom_call.1} parent=27 // pred_fallthru
          _
        // Predicated region
        $region69: #{tpu_custom_call.1} parent=27 // pred_check
          %p733 = pneg %p386
        $region70: #{tpu_custom_call.1} parent=27 // pred_check_branch
          %735 = sbr.rel (%p733) target = $region72
        $region71: #{tpu_custom_call.1} parent=27 // pred_region
          %s736 = sand.u32 %s31, 1
          %s737 = scalar_lea.sflag [#allocation5], %s736
          %s738 = sand.u32 %s376, 1
          %s739 = smul.addr %s738, 32
          %s740 = scalar_lea.vmem [#allocation21], %s739
          %s742 = ssub.s32 512, 512
          %743 = vsyncadd %s737, %s742
          %s744 = smul.addr %s38, 8
          %s745 = smul.addr %s744, 64
          %s746 = scalar_lea.hbm %s13, %s745
          %s747 = sshll.u32 %s740, 4
          %s748 = int_to_ptr.vmem [resolvable:$true] %s747
          %753 = dma.hbm_to_vmem [thread:$0]  %s746, 512, %s748, %s737, 64, 64, 4
        $region72: #{tpu_custom_call.1} parent=27 // pred_fallthru
          _
        // Predicated region
        $region73: #{tpu_custom_call.1} parent=27 // pred_check
          %p754 = pneg %p412
        $region74: #{tpu_custom_call.1} parent=27 // pred_check_branch
          %756 = sbr.rel (%p754) target = $region76
        $region75: #{tpu_custom_call.1} parent=27 // pred_region
          %s757 = sand.u32 %s31, 1
          %s758 = scalar_lea.sflag [#allocation5], %s757
          %s759 = sand.u32 %s402, 1
          %s760 = scalar_lea.vmem [#allocation22], %s759
          %s762 = ssub.s32 16, 16
          %763 = vsyncadd %s758, %s762
          %s764 = smul.addr %s38, 16
          %s765 = scalar_lea.hbm %s14, %s764
          %s767 = sshll.u32 %s760, 4
          %s768 = int_to_ptr.vmem [resolvable:$true] %s767
          %770 = dma.hbm_to_vmem [thread:$0]  %s765, 16, %s768, %s758
        $region76: #{tpu_custom_call.1} parent=27 // pred_fallthru
          _
        // Predicated region
        $region77: #{tpu_custom_call.1} parent=27 // pred_check
          %p771 = pneg %p438
        $region78: #{tpu_custom_call.1} parent=27 // pred_check_branch
          %773 = sbr.rel (%p771) target = $region80
        $region79: #{tpu_custom_call.1} parent=27 // pred_region
          %s774 = sand.u32 %s31, 1
          %s775 = scalar_lea.sflag [#allocation5], %s774
          %s776 = sand.u32 %s428, 1
          %s777 = scalar_lea.vmem [#allocation23], %s776
          %s779 = ssub.s32 16, 16
          %780 = vsyncadd %s775, %s779
          %s781 = smul.addr %s38, 16
          %s782 = scalar_lea.hbm %s15, %s781
          %s784 = sshll.u32 %s777, 4
          %s785 = int_to_ptr.vmem [resolvable:$true] %s784
          %787 = dma.hbm_to_vmem [thread:$0]  %s782, 16, %s785, %s775
        $region80: #{tpu_custom_call.1} parent=27 // pred_fallthru
          _
        // Predicated region
        $region81: #{tpu_custom_call.1} parent=27 // pred_check
          %p788 = pneg %p464
        $region82: #{tpu_custom_call.1} parent=27 // pred_check_branch
          %790 = sbr.rel (%p788) target = $region84
        $region83: #{tpu_custom_call.1} parent=27 // pred_region
          %s791 = sand.u32 %s31, 1
          %s792 = scalar_lea.sflag [#allocation5], %s791
          %s793 = sand.u32 %s454, 1
          %s794 = scalar_lea.vmem [#allocation24], %s793
          %s796 = ssub.s32 16, 16
          %797 = vsyncadd %s792, %s796
          %s798 = smul.addr %s38, 16
          %s799 = scalar_lea.hbm %s16, %s798
          %s801 = sshll.u32 %s794, 4
          %s802 = int_to_ptr.vmem [resolvable:$true] %s801
          %804 = dma.hbm_to_vmem [thread:$0]  %s799, 16, %s802, %s792
        $region84: #{tpu_custom_call.1} parent=27 // pred_fallthru
          _
      $region28: #{tpu_custom_call.1} parent=5 // pred_fallthru
        _
      %p805 = scmp.le.s32.totalorder 1, %s31
      %p806 = scmp.lt.s32.totalorder %s31, 5
      %p807 = pnand %p805, %p806
      %p808 = pneg %p807
      // Predicated region
      $region85: #{tpu_custom_call.1} parent=5 // pred_check
        _
      $region86: #{tpu_custom_call.1} parent=5 // pred_check_branch
        %810 = sbr.rel (%p807) target = $region88
      $region87: #{tpu_custom_call.1} parent=5 // pred_region
        %s811 = ssub.s32 %s31, 1
        %s812 = sand.u32 %s36, 1
        %s813 = scalar_lea.sflag [#allocation5], %s812
        %s814 = sand.u32 %s56, 1
        %s815 = smul.addr %s814, 8
        %s816 = scalar_lea.vmem [#allocation4], %s815
        // Predicated region
        $region89: #{tpu_custom_call.1} parent=87 // pred_check
          %p817 = pneg %p69
        $region90: #{tpu_custom_call.1} parent=87 // pred_check_branch
          %819 = sbr.rel (%p817) target = $region92
        $region91: #{tpu_custom_call.1} parent=87 // pred_region
          %820 = dma.done %s813, 128
        $region92: #{tpu_custom_call.1} parent=87 // pred_fallthru
          _
        // Predicated region
        $region93: #{tpu_custom_call.1} parent=87 // pred_check
          %p821 = pneg %p90
        $region94: #{tpu_custom_call.1} parent=87 // pred_check_branch
          %823 = sbr.rel (%p821) target = $region96
        $region95: #{tpu_custom_call.1} parent=87 // pred_region
          %824 = dma.done [#allocation8], 128
        $region96: #{tpu_custom_call.1} parent=87 // pred_fallthru
          _
        // Predicated region
        $region97: #{tpu_custom_call.1} parent=87 // pred_check
          %p825 = pneg %p111
        $region98: #{tpu_custom_call.1} parent=87 // pred_check_branch
          %827 = sbr.rel (%p825) target = $region100
        $region99: #{tpu_custom_call.1} parent=87 // pred_region
          %828 = dma.done [#allocation8], 16
        $region100: #{tpu_custom_call.1} parent=87 // pred_fallthru
          _
        // Predicated region
        $region101: #{tpu_custom_call.1} parent=87 // pred_check
          %p829 = pneg %p132
        $region102: #{tpu_custom_call.1} parent=87 // pred_check_branch
          %831 = sbr.rel (%p829) target = $region104
        $region103: #{tpu_custom_call.1} parent=87 // pred_region
          %832 = dma.done [#allocation11], 16
        $region104: #{tpu_custom_call.1} parent=87 // pred_fallthru
          _
        %s833 = sand.u32 %s36, 1
        %s834 = scalar_lea.sflag [#allocation5], %s833
        %s835 = sand.u32 %s145, 1
        %s836 = scalar_lea.vmem [#allocation12], %s835
        // Predicated region
        $region105: #{tpu_custom_call.1} parent=87 // pred_check
          %p837 = pneg %p158
        $region106: #{tpu_custom_call.1} parent=87 // pred_check_branch
          %839 = sbr.rel (%p837) target = $region108
        $region107: #{tpu_custom_call.1} parent=87 // pred_region
          %840 = dma.done %s834, 16
        $region108: #{tpu_custom_call.1} parent=87 // pred_fallthru
          _
        %s841 = sand.u32 %s36, 1
        %s842 = scalar_lea.sflag [#allocation5], %s841
        %s843 = sand.u32 %s171, 1
        %s844 = smul.addr %s843, 16
        %s845 = scalar_lea.vmem [#allocation13], %s844
        // Predicated region
        $region109: #{tpu_custom_call.1} parent=87 // pred_check
          %p846 = pneg %p184
        $region110: #{tpu_custom_call.1} parent=87 // pred_check_branch
          %848 = sbr.rel (%p846) target = $region112
        $region111: #{tpu_custom_call.1} parent=87 // pred_region
          %849 = dma.done %s842, 256
        $region112: #{tpu_custom_call.1} parent=87 // pred_fallthru
          _
        %s850 = sand.u32 %s36, 1
        %s851 = scalar_lea.sflag [#allocation5], %s850
        %s852 = sand.u32 %s197, 1
        %s853 = scalar_lea.vmem [#allocation14], %s852
        // Predicated region
        $region113: #{tpu_custom_call.1} parent=87 // pred_check
          %p854 = pneg %p210
        $region114: #{tpu_custom_call.1} parent=87 // pred_check_branch
          %856 = sbr.rel (%p854) target = $region116
        $region115: #{tpu_custom_call.1} parent=87 // pred_region
          %857 = dma.done %s851, 16
        $region116: #{tpu_custom_call.1} parent=87 // pred_fallthru
          _
        %s858 = sand.u32 %s36, 1
        %s859 = scalar_lea.sflag [#allocation5], %s858
        %s860 = sand.u32 %s223, 1
        %s861 = smul.addr %s860, 16
        %s862 = scalar_lea.vmem [#allocation15], %s861
        // Predicated region
        $region117: #{tpu_custom_call.1} parent=87 // pred_check
          %p863 = pneg %p236
        $region118: #{tpu_custom_call.1} parent=87 // pred_check_branch
          %865 = sbr.rel (%p863) target = $region120
        $region119: #{tpu_custom_call.1} parent=87 // pred_region
          %866 = dma.done %s859, 256
        $region120: #{tpu_custom_call.1} parent=87 // pred_fallthru
          _
        %s867 = sand.u32 %s36, 1
        %s868 = scalar_lea.sflag [#allocation5], %s867
        %s869 = sand.u32 %s249, 1
        %s870 = scalar_lea.vmem [#allocation16], %s869
        // Predicated region
        $region121: #{tpu_custom_call.1} parent=87 // pred_check
          %p871 = pneg %p262
        $region122: #{tpu_custom_call.1} parent=87 // pred_check_branch
          %873 = sbr.rel (%p871) target = $region124
        $region123: #{tpu_custom_call.1} parent=87 // pred_region
          %874 = dma.done %s868, 16
        $region124: #{tpu_custom_call.1} parent=87 // pred_fallthru
          _
        %s875 = sand.u32 %s36, 1
        %s876 = scalar_lea.sflag [#allocation5], %s875
        %s877 = sand.u32 %s275, 1
        %s878 = scalar_lea.vmem [#allocation17], %s877
        // Predicated region
        $region125: #{tpu_custom_call.1} parent=87 // pred_check
          %p879 = pneg %p288
        $region126: #{tpu_custom_call.1} parent=87 // pred_check_branch
          %881 = sbr.rel (%p879) target = $region128
        $region127: #{tpu_custom_call.1} parent=87 // pred_region
          %882 = dma.done %s876, 16
        $region128: #{tpu_custom_call.1} parent=87 // pred_fallthru
          _
        %s883 = sand.u32 %s36, 1
        %s884 = scalar_lea.sflag [#allocation5], %s883
        %s885 = sand.u32 %s301, 1
        %s886 = scalar_lea.vmem [#allocation18], %s885
        // Predicated region
        $region129: #{tpu_custom_call.1} parent=87 // pred_check
          %p887 = pneg %p314
        $region130: #{tpu_custom_call.1} parent=87 // pred_check_branch
          %889 = sbr.rel (%p887) target = $region132
        $region131: #{tpu_custom_call.1} parent=87 // pred_region
          %890 = dma.done %s884, 16
        $region132: #{tpu_custom_call.1} parent=87 // pred_fallthru
          _
        %s891 = sand.u32 %s36, 1
        %s892 = scalar_lea.sflag [#allocation5], %s891
        %s893 = sand.u32 %s327, 1
        %s894 = smul.addr %s893, 16
        %s895 = scalar_lea.vmem [#allocation19], %s894
        // Predicated region
        $region133: #{tpu_custom_call.1} parent=87 // pred_check
          %p896 = pneg %p340
        $region134: #{tpu_custom_call.1} parent=87 // pred_check_branch
          %898 = sbr.rel (%p896) target = $region136
        $region135: #{tpu_custom_call.1} parent=87 // pred_region
          %899 = dma.done %s892, 256
        $region136: #{tpu_custom_call.1} parent=87 // pred_fallthru
          _
        %s900 = sand.u32 %s36, 1
        %s901 = scalar_lea.sflag [#allocation5], %s900
        %s902 = sand.u32 %s353, 1
        %s903 = scalar_lea.vmem [#allocation20], %s902
        // Predicated region
        $region137: #{tpu_custom_call.1} parent=87 // pred_check
          %p904 = pneg %p366
        $region138: #{tpu_custom_call.1} parent=87 // pred_check_branch
          %906 = sbr.rel (%p904) target = $region140
        $region139: #{tpu_custom_call.1} parent=87 // pred_region
          %907 = dma.done %s901, 16
        $region140: #{tpu_custom_call.1} parent=87 // pred_fallthru
          _
        %s908 = sand.u32 %s36, 1
        %s909 = scalar_lea.sflag [#allocation5], %s908
        %s910 = sand.u32 %s379, 1
        %s911 = smul.addr %s910, 32
        %s912 = scalar_lea.vmem [#allocation21], %s911
        // Predicated region
        $region141: #{tpu_custom_call.1} parent=87 // pred_check
          %p913 = pneg %p392
        $region142: #{tpu_custom_call.1} parent=87 // pred_check_branch
          %915 = sbr.rel (%p913) target = $region144
        $region143: #{tpu_custom_call.1} parent=87 // pred_region
          %916 = dma.done %s909, 512
        $region144: #{tpu_custom_call.1} parent=87 // pred_fallthru
          _
        %s917 = sand.u32 %s36, 1
        %s918 = scalar_lea.sflag [#allocation5], %s917
        %s919 = sand.u32 %s405, 1
        %s920 = scalar_lea.vmem [#allocation22], %s919
        // Predicated region
        $region145: #{tpu_custom_call.1} parent=87 // pred_check
          %p921 = pneg %p418
        $region146: #{tpu_custom_call.1} parent=87 // pred_check_branch
          %923 = sbr.rel (%p921) target = $region148
        $region147: #{tpu_custom_call.1} parent=87 // pred_region
          %924 = dma.done %s918, 16
        $region148: #{tpu_custom_call.1} parent=87 // pred_fallthru
          _
        %s925 = sand.u32 %s36, 1
        %s926 = scalar_lea.sflag [#allocation5], %s925
        %s927 = sand.u32 %s431, 1
        %s928 = scalar_lea.vmem [#allocation23], %s927
        // Predicated region
        $region149: #{tpu_custom_call.1} parent=87 // pred_check
          %p929 = pneg %p444
        $region150: #{tpu_custom_call.1} parent=87 // pred_check_branch
          %931 = sbr.rel (%p929) target = $region152
        $region151: #{tpu_custom_call.1} parent=87 // pred_region
          %932 = dma.done %s926, 16
        $region152: #{tpu_custom_call.1} parent=87 // pred_fallthru
          _
        %s933 = sand.u32 %s36, 1
        %s934 = scalar_lea.sflag [#allocation5], %s933
        %s935 = sand.u32 %s457, 1
        %s936 = scalar_lea.vmem [#allocation24], %s935
        // Predicated region
        $region153: #{tpu_custom_call.1} parent=87 // pred_check
          %p937 = pneg %p470
        $region154: #{tpu_custom_call.1} parent=87 // pred_check_branch
          %939 = sbr.rel (%p937) target = $region156
        $region155: #{tpu_custom_call.1} parent=87 // pred_region
          %940 = dma.done %s934, 16
        $region156: #{tpu_custom_call.1} parent=87 // pred_fallthru
          _
        %s941 = sand.u32 %s36, 1
        %s942 = scalar_lea.sflag [#allocation5], %s941
        %s943 = sand.u32 %s56, 1
        %s944 = smul.addr %s943, 8
        %s945 = scalar_lea.vmem [#allocation4], %s944
        %p946 = pneg %p69
        %p947 = pneg %p66
        %p948 = pneg %p90
        %p949 = pneg %p87
        %p950 = pneg %p111
        %p951 = pneg %p108
        %p952 = pneg %p132
        %p953 = pneg %p129
        %s954 = sand.u32 %s36, 1
        %s955 = scalar_lea.sflag [#allocation5], %s954
        %s956 = sand.u32 %s145, 1
        %s957 = scalar_lea.vmem [#allocation12], %s956
        %p958 = pneg %p158
        %p959 = pneg %p155
        %s960 = sand.u32 %s36, 1
        %s961 = scalar_lea.sflag [#allocation5], %s960
        %s962 = sand.u32 %s171, 1
        %s963 = smul.addr %s962, 16
        %s964 = scalar_lea.vmem [#allocation13], %s963
        %p965 = pneg %p184
        %p966 = pneg %p181
        %s967 = sand.u32 %s36, 1
        %s968 = scalar_lea.sflag [#allocation5], %s967
        %s969 = sand.u32 %s197, 1
        %s970 = scalar_lea.vmem [#allocation14], %s969
        %p971 = pneg %p210
        %p972 = pneg %p207
        %s973 = sand.u32 %s36, 1
        %s974 = scalar_lea.sflag [#allocation5], %s973
        %s975 = sand.u32 %s223, 1
        %s976 = smul.addr %s975, 16
        %s977 = scalar_lea.vmem [#allocation15], %s976
        %p978 = pneg %p236
        %p979 = pneg %p233
        %s980 = sand.u32 %s36, 1
        %s981 = scalar_lea.sflag [#allocation5], %s980
        %s982 = sand.u32 %s249, 1
        %s983 = scalar_lea.vmem [#allocation16], %s982
        %p984 = pneg %p262
        %p985 = pneg %p259
        %s986 = sand.u32 %s36, 1
        %s987 = scalar_lea.sflag [#allocation5], %s986
        %s988 = sand.u32 %s275, 1
        %s989 = scalar_lea.vmem [#allocation17], %s988
        %p990 = pneg %p288
        %p991 = pneg %p285
        %s992 = sand.u32 %s36, 1
        %s993 = scalar_lea.sflag [#allocation5], %s992
        %s994 = sand.u32 %s301, 1
        %s995 = scalar_lea.vmem [#allocation18], %s994
        %p996 = pneg %p314
        %p997 = pneg %p311
        %s998 = sand.u32 %s36, 1
        %s999 = scalar_lea.sflag [#allocation5], %s998
        %s1000 = sand.u32 %s327, 1
        %s1001 = smul.addr %s1000, 16
        %s1002 = scalar_lea.vmem [#allocation19], %s1001
        %p1003 = pneg %p340
        %p1004 = pneg %p337
        %s1005 = sand.u32 %s36, 1
        %s1006 = scalar_lea.sflag [#allocation5], %s1005
        %s1007 = sand.u32 %s353, 1
        %s1008 = scalar_lea.vmem [#allocation20], %s1007
        %p1009 = pneg %p366
        %p1010 = pneg %p363
        %s1011 = sand.u32 %s36, 1
        %s1012 = scalar_lea.sflag [#allocation5], %s1011
        %s1013 = sand.u32 %s379, 1
        %s1014 = smul.addr %s1013, 32
        %s1015 = scalar_lea.vmem [#allocation21], %s1014
        %p1016 = pneg %p392
        %p1017 = pneg %p389
        %s1018 = sand.u32 %s36, 1
        %s1019 = scalar_lea.sflag [#allocation5], %s1018
        %s1020 = sand.u32 %s405, 1
        %s1021 = scalar_lea.vmem [#allocation22], %s1020
        %p1022 = pneg %p418
        %p1023 = pneg %p415
        %s1024 = sand.u32 %s36, 1
        %s1025 = scalar_lea.sflag [#allocation5], %s1024
        %s1026 = sand.u32 %s431, 1
        %s1027 = scalar_lea.vmem [#allocation23], %s1026
        %p1028 = pneg %p444
        %p1029 = pneg %p441
        %s1030 = sand.u32 %s36, 1
        %s1031 = scalar_lea.sflag [#allocation5], %s1030
        %s1032 = sand.u32 %s457, 1
        %s1033 = scalar_lea.vmem [#allocation24], %s1032
        %p1034 = pneg %p470
        %p1035 = pneg %p467
        %p1036 = pneg %p498
        %p1037 = pneg %p495
        %s1038 = sand.u32 %s485, 1
        %s1039 = scalar_lea.sflag [#allocation6], %s1038
        %s1040 = sand.u32 %s485, 1
        %s1041 = smul.addr %s1040, 4
        %s1042 = scalar_lea.vmem [#allocation25], %s1041
        %p1044 = scmp.eq.s32.totalorder %s40, 0
        // Predicated region
        $region157: #{tpu_custom_call.1} parent=87 // pred_check
          %p1045 = pneg %p1044
        $region158: #{tpu_custom_call.1} parent=87 // pred_check_branch
          %1047 = sbr.rel (%p1045) target = $region160
        $region159: #{tpu_custom_call.1} parent=87 // pred_region
          %v1048 = vld [vmem:[%s816] sm:$0xff]
          %v1049 = vld [vmem:[#allocation7] sm:$0xff]
          %v1050 = vadd.f32 %v1048, %v1049
          %v1051 = vld [vmem:[#allocation9] sm:$0x1]
          %v1052 = vld [vmem:[#allocation10] sm:$0x1]
          %vm1053 = vcmask 261120
          %v1054 = vsel %vm1053, %v1050, 0.0
          %1055 = vadd.xlane.f32.xlu0 %v1054
          %v1056 = vpop.xlane.xlu0 %1055
          %v1057 = vrcp.pop 32.0
          %v1058 = vmul.f32 %v1056, %v1057
          %v1059 = vsub.f32 %v1050, %v1058
          %v1060 = vmul.f32 %v1059, %v1059
          %v1061 = vsel %vm1053, %v1060, 0.0
          %1062 = vadd.xlane.f32.xlu0 %v1061
          %v1063 = vpop.xlane.xlu0 %1062
          %v1064 = vmul.f32 %v1063, %v1057
          %v1065 = vadd.f32 %v1064, 1e-12
          %v1066 = vrsqrt.pop %v1065
          %v1067 = vmul.f32 %v1059, %v1066
          %v1069 = vlaneseq
          %v1070 = vshrl.u32 %v1069, 7
          %v1071 = vsub.s32 0, %v1070
          %v1072 = vrot.slane %v1051, %v1071
          %v1074 = vmul.f32 %v1067, %v1072
          %v1076 = vlaneseq
          %v1077 = vshrl.u32 %v1076, 7
          %v1078 = vsub.s32 0, %v1077
          %v1079 = vrot.slane %v1052, %v1078
          %v1081 = vadd.f32 %v1074, %v1079
          %v1082 = vpack.c.bf16 %v1081, %v1081
          %s1083 = smul.addr %s41, 4
          %s1084 = scalar_lea.vmem [#allocation2], %s1083
          %vm1085 = vcmask 257024
          %1086 = vst.msk [vmem:[%s1084] sm:$0xf] %vm1085, %v1082
        $region160: #{tpu_custom_call.1} parent=87 // pred_fallthru
          _
        %s1087 = smul.addr %s41, 4
        %s1088 = scalar_lea.vmem [#allocation2], %s1087
        %v1089 = vld [vmem:[%s1088] sm:$0xf]
        %v1090 = vld [vmem:[%s845] sm:$0xf]
        %v1091 = vld [vmem:[%s845 + $0x4] sm:$0xf]
        %v1092 = vld [vmem:[%s845 + $0x8] sm:$0xf]
        %v1093 = vld [vmem:[%s845 + $0xc] sm:$0xf]
        %v1094 = vld [vmem:[%s853] sm:$0x1]
        %v1096 = vlaneseq
        %v1097 = vshrl.u32 %v1096, 7
        %v1098 = vsub.s32 0, %v1097
        %v1099 = vrot.slane %v1094, %v1098
        %v1105 = vunpack.c.l.b16 %v1090
        %v1106 = vunpack.c.l.b16 %v1091
        %v1107 = vunpack.c.l.b16 %v1092
        %v1108 = vunpack.c.l.b16 %v1093
        %v1109 = vpack.c.b16 %v1106, %v1105
        %v1110 = vpack.c.b16 %v1108, %v1107
        %vm1113 = vcmask 261120
        %v1115 = vsel %vm1113, %v1089, 0
        %1117 = vmatprep.subr.bf16.mxu0 0
        %1118 = vmatpush1.bf16.msra.mxu0 %v1109
        %1119 = vmatprep.subr.bf16.mxu0 0
        %1120 = vmatpush1.bf16.msra.mxu0 %v1110
        %1121 = vmatprep.subr.bf16.mxu0 0
        %1122 = vmatpush1.bf16.msra.mxu0 0
        %1123 = vmatprep.subr.bf16.mxu0 0
        %1124 = vmatpush1.bf16.msra.mxu0 0
        %1125 = vmatprep.subr.bf16.mxu0 0
        %1126 = vmatpush1.bf16.msra.mxu0 0
        %1127 = vmatprep.subr.bf16.mxu0 0
        %1128 = vmatpush1.bf16.msra.mxu0 0
        %1129 = vmatprep.subr.bf16.mxu0 0
        %1130 = vmatpush1.bf16.msra.mxu0 0
        %1131 = vmatprep.subr.bf16.mxu0 0
        %1132 = vmatpush1.bf16.msra.mxu0 0
        %1133 = vmatprep.subr.bf16.mxu0 0
        %1134 = vmatpush1.bf16.msra.mxu0 0
        %1135 = vmatprep.subr.bf16.mxu0 0
        %1136 = vmatpush1.bf16.msra.mxu0 0
        %1137 = vmatprep.subr.bf16.mxu0 0
        %1138 = vmatpush1.bf16.msra.mxu0 0
        %1139 = vmatprep.subr.bf16.mxu0 0
        %1140 = vmatpush1.bf16.msra.mxu0 0
        %1141 = vmatprep.subr.bf16.mxu0 0
        %1142 = vmatpush1.bf16.msra.mxu0 0
        %1143 = vmatprep.subr.bf16.mxu0 0
        %1144 = vmatpush1.bf16.msra.mxu0 0
        %1145 = vmatprep.subr.bf16.mxu0 0
        %1146 = vmatpush1.bf16.msra.mxu0 0
        %1147 = vmatprep.subr.bf16.mxu0 0
        %1148 = vmatpush1.bf16.msra.mxu0 0
        %1149 = vmatprep.mubr.bf16.mxu0 0
        %1150 = vmatmul.mubr.bf16.gmra.mrb[0].mxu0 %v1115
        %v1151 = vpop.f32.mrb[0].mxu0
        %v1152 = vadd.f32 %v1099, %v1151
        %v1153 = vpop.f32.mrb[0].mxu0
        %v1154 = vpop.f32.mrb[0].mxu0
        %v1155 = vpop.f32.mrb[0].mxu0
        %1156 = vdwg.mxu0
        %v1157 = vpack.c.bf16 %v1152, %v1152
        %v1158 = vld [vmem:[%s836] sm:$0x1]
        %v1160 = vlaneseq
        %v1161 = vshrl.u32 %v1160, 7
        %v1162 = vsub.s32 0, %v1161
        %v1163 = vrot.slane %v1158, %v1162
        %1166 = vrot.lane.b32.xlu0 %v1157, 96
        %v1167 = vpop.permute.xlu0 %1166
        %vm1168 = vcmask 64512
        %v1170 = vsel %vm1168, %v1157, 0
        %v1173 = vsel %vm1168, %v1167, 0
        %1175 = vmatprep.subr.bf16.mxu0 0
        %1176 = vmatpush1.bf16.xpose.msra.mxu0 %v1173
        %1177 = vmatprep.subr.bf16.mxu0 0
        %1178 = vmatpush1.bf16.xpose.msra.mxu0 0
        %1179 = vmatprep.subr.bf16.mxu0 0
        %1180 = vmatpush1.bf16.xpose.msra.mxu0 0
        %1181 = vmatprep.subr.bf16.mxu0 0
        %1182 = vmatpush1.bf16.xpose.msra.mxu0 0
        %1183 = vmatprep.subr.bf16.mxu0 0
        %1184 = vmatpush1.bf16.xpose.msra.mxu0 0
        %1185 = vmatprep.subr.bf16.mxu0 0
        %1186 = vmatpush1.bf16.xpose.msra.mxu0 0
        %1187 = vmatprep.subr.bf16.mxu0 0
        %1188 = vmatpush1.bf16.xpose.msra.mxu0 0
        %1189 = vmatprep.subr.bf16.mxu0 0
        %1190 = vmatpush1.bf16.xpose.msra.mxu0 0
        %1191 = vmatprep.subr.bf16.mxu0 0
        %1192 = vmatpush1.bf16.xpose.msra.mxu0 0
        %1193 = vmatprep.subr.bf16.mxu0 0
        %1194 = vmatpush1.bf16.xpose.msra.mxu0 0
        %1195 = vmatprep.subr.bf16.mxu0 0
        %1196 = vmatpush1.bf16.xpose.msra.mxu0 0
        %1197 = vmatprep.subr.bf16.mxu0 0
        %1198 = vmatpush1.bf16.xpose.msra.mxu0 0
        %1199 = vmatprep.subr.bf16.mxu0 0
        %1200 = vmatpush1.bf16.xpose.msra.mxu0 0
        %1201 = vmatprep.subr.bf16.mxu0 0
        %1202 = vmatpush1.bf16.xpose.msra.mxu0 0
        %1203 = vmatprep.subr.bf16.mxu0 0
        %1204 = vmatpush1.bf16.xpose.msra.mxu0 0
        %1205 = vmatprep.subr.bf16.mxu0 0
        %1206 = vmatpush1.bf16.xpose.msra.mxu0 0
        %1207 = vmatprep.mubr.bf16.mxu0 0
        %1208 = vmatmul.mubr.bf16.gmra.mrb[0].mxu0 %v1170
        %v1209 = vpop.f32.mrb[0].mxu0
        %v1210 = vadd.f32 %v1163, %v1209
        %v1211 = vpop.f32.mrb[0].mxu0
        %v1212 = vpop.f32.mrb[0].mxu0
        %v1213 = vpop.f32.mrb[0].mxu0
        %1214 = vdwg.mxu0
        %v1215 = vsel %vm1168, %v1210, -inf
        %1216 = vmax.xlane.f32.xlu0 %v1215
        %v1217 = vpop.xlane.xlu0 %1216
        %v1218 = vsub.f32 %v1210, %v1217
        %v1219 = vmul.f32 %v1218, 1.442695
        %v1220 = vpow.pop %v1219
        %v1221 = vsel %vm1168, %v1220, 0.0
        %1222 = vadd.xlane.f32.xlu0 %v1221
        %v1223 = vpop.xlane.xlu0 %1222
        %v1224 = vrcp.pop %v1223
        %v1225 = vmul.f32 %v1220, %v1224
        %v1226 = vpack.c.bf16 %v1225, %v1225
        %1227 = vrot.lane.b32.xlu0 %v1157, 64
        %v1228 = vpop.permute.xlu0 %1227
        %v1230 = vsel %vm1168, %v1226, 0
        %vm1232 = vcmask 1043456
        %v1234 = vsel %vm1232, %v1228, 0
        %1236 = vmatprep.subr.bf16.mxu0 0
        %1237 = vmatpush1.bf16.msra.mxu0 %v1234
        %1238 = vmatprep.subr.bf16.mxu0 0
        %1239 = vmatpush1.bf16.msra.mxu0 0
        %1240 = vmatprep.subr.bf16.mxu0 0
        %1241 = vmatpush1.bf16.msra.mxu0 0
        %1242 = vmatprep.subr.bf16.mxu0 0
        %1243 = vmatpush1.bf16.msra.mxu0 0
        %1244 = vmatprep.subr.bf16.mxu0 0
        %1245 = vmatpush1.bf16.msra.mxu0 0
        %1246 = vmatprep.subr.bf16.mxu0 0
        %1247 = vmatpush1.bf16.msra.mxu0 0
        %1248 = vmatprep.subr.bf16.mxu0 0
        %1249 = vmatpush1.bf16.msra.mxu0 0
        %1250 = vmatprep.subr.bf16.mxu0 0
        %1251 = vmatpush1.bf16.msra.mxu0 0
        %1252 = vmatprep.subr.bf16.mxu0 0
        %1253 = vmatpush1.bf16.msra.mxu0 0
        %1254 = vmatprep.subr.bf16.mxu0 0
        %1255 = vmatpush1.bf16.msra.mxu0 0
        %1256 = vmatprep.subr.bf16.mxu0 0
        %1257 = vmatpush1.bf16.msra.mxu0 0
        %1258 = vmatprep.subr.bf16.mxu0 0
        %1259 = vmatpush1.bf16.msra.mxu0 0
        %1260 = vmatprep.subr.bf16.mxu0 0
        %1261 = vmatpush1.bf16.msra.mxu0 0
        %1262 = vmatprep.subr.bf16.mxu0 0
        %1263 = vmatpush1.bf16.msra.mxu0 0
        %1264 = vmatprep.subr.bf16.mxu0 0
        %1265 = vmatpush1.bf16.msra.mxu0 0
        %1266 = vmatprep.subr.bf16.mxu0 0
        %1267 = vmatpush1.bf16.msra.mxu0 0
        %1268 = vmatprep.mubr.bf16.mxu0 0
        %1269 = vmatmul.mubr.bf16.gmra.mrb[0].mxu0 %v1230
        %v1270 = vpop.f32.mrb[0].mxu0
        %v1271 = vadd.f32 0.0, %v1270
        %v1272 = vpop.f32.mrb[0].mxu0
        %v1273 = vpop.f32.mrb[0].mxu0
        %v1274 = vpop.f32.mrb[0].mxu0
        %1275 = vdwg.mxu0
        %v1276 = vpack.c.bf16 %v1271, %v1271
        %vm1277 = vcmask 60416
        %1278 = vst.msk [vmem:[#allocation3] sm:$0xf] %vm1277, %v1276
        %1279 = vrot.lane.b32.xlu0 %v1157, 120
        %v1280 = vpop.permute.xlu0 %1279
        %1281 = vrot.lane.b32.xlu0 %v1157, 88
        %v1282 = vpop.permute.xlu0 %1281
        %v1284 = vsel %vm1168, %v1280, 0
        %v1287 = vsel %vm1168, %v1282, 0
        %1289 = vmatprep.subr.bf16.mxu0 0
        %1290 = vmatpush1.bf16.xpose.msra.mxu0 %v1287
        %1291 = vmatprep.subr.bf16.mxu0 0
        %1292 = vmatpush1.bf16.xpose.msra.mxu0 0
        %1293 = vmatprep.subr.bf16.mxu0 0
        %1294 = vmatpush1.bf16.xpose.msra.mxu0 0
        %1295 = vmatprep.subr.bf16.mxu0 0
        %1296 = vmatpush1.bf16.xpose.msra.mxu0 0
        %1297 = vmatprep.subr.bf16.mxu0 0
        %1298 = vmatpush1.bf16.xpose.msra.mxu0 0
        %1299 = vmatprep.subr.bf16.mxu0 0
        %1300 = vmatpush1.bf16.xpose.msra.mxu0 0
        %1301 = vmatprep.subr.bf16.mxu0 0
        %1302 = vmatpush1.bf16.xpose.msra.mxu0 0
        %1303 = vmatprep.subr.bf16.mxu0 0
        %1304 = vmatpush1.bf16.xpose.msra.mxu0 0
        %1305 = vmatprep.subr.bf16.mxu0 0
        %1306 = vmatpush1.bf16.xpose.msra.mxu0 0
        %1307 = vmatprep.subr.bf16.mxu0 0
        %1308 = vmatpush1.bf16.xpose.msra.mxu0 0
        %1309 = vmatprep.subr.bf16.mxu0 0
        %1310 = vmatpush1.bf16.xpose.msra.mxu0 0
        %1311 = vmatprep.subr.bf16.mxu0 0
        %1312 = vmatpush1.bf16.xpose.msra.mxu0 0
        %1313 = vmatprep.subr.bf16.mxu0 0
        %1314 = vmatpush1.bf16.xpose.msra.mxu0 0
        %1315 = vmatprep.subr.bf16.mxu0 0
        %1316 = vmatpush1.bf16.xpose.msra.mxu0 0
        %1317 = vmatprep.subr.bf16.mxu0 0
        %1318 = vmatpush1.bf16.xpose.msra.mxu0 0
        %1319 = vmatprep.subr.bf16.mxu0 0
        %1320 = vmatpush1.bf16.xpose.msra.mxu0 0
        %1321 = vmatprep.mubr.bf16.mxu0 0
        %1322 = vmatmul.mubr.bf16.gmra.mrb[0].mxu0 %v1284
        %v1323 = vpop.f32.mrb[0].mxu0
        %v1324 = vadd.f32 %v1163, %v1323
        %v1325 = vpop.f32.mrb[0].mxu0
        %v1326 = vpop.f32.mrb[0].mxu0
        %v1327 = vpop.f32.mrb[0].mxu0
        %1328 = vdwg.mxu0
        %v1329 = vsel %vm1168, %v1324, -inf
        %1330 = vmax.xlane.f32.xlu0 %v1329
        %v1331 = vpop.xlane.xlu0 %1330
        %v1332 = vsub.f32 %v1324, %v1331
        %v1333 = vmul.f32 %v1332, 1.442695
        %v1334 = vpow.pop %v1333
        %v1335 = vsel %vm1168, %v1334, 0.0
        %1336 = vadd.xlane.f32.xlu0 %v1335
        %v1337 = vpop.xlane.xlu0 %1336
        %v1338 = vrcp.pop %v1337
        %v1339 = vmul.f32 %v1334, %v1338
        %v1340 = vpack.c.bf16 %v1339, %v1339
        %1341 = vrot.lane.b32.xlu0 %v1157, 56
        %v1342 = vpop.permute.xlu0 %1341
        %v1344 = vsel %vm1168, %v1340, 0
        %v1347 = vsel %vm1232, %v1342, 0
        %1349 = vmatprep.subr.bf16.mxu0 0
        %1350 = vmatpush1.bf16.msra.mxu0 %v1347
        %1351 = vmatprep.subr.bf16.mxu0 0
        %1352 = vmatpush1.bf16.msra.mxu0 0
        %1353 = vmatprep.subr.bf16.mxu0 0
        %1354 = vmatpush1.bf16.msra.mxu0 0
        %1355 = vmatprep.subr.bf16.mxu0 0
        %1356 = vmatpush1.bf16.msra.mxu0 0
        %1357 = vmatprep.subr.bf16.mxu0 0
        %1358 = vmatpush1.bf16.msra.mxu0 0
        %1359 = vmatprep.subr.bf16.mxu0 0
        %1360 = vmatpush1.bf16.msra.mxu0 0
        %1361 = vmatprep.subr.bf16.mxu0 0
        %1362 = vmatpush1.bf16.msra.mxu0 0
        %1363 = vmatprep.subr.bf16.mxu0 0
        %1364 = vmatpush1.bf16.msra.mxu0 0
        %1365 = vmatprep.subr.bf16.mxu0 0
        %1366 = vmatpush1.bf16.msra.mxu0 0
        %1367 = vmatprep.subr.bf16.mxu0 0
        %1368 = vmatpush1.bf16.msra.mxu0 0
        %1369 = vmatprep.subr.bf16.mxu0 0
        %1370 = vmatpush1.bf16.msra.mxu0 0
        %1371 = vmatprep.subr.bf16.mxu0 0
        %1372 = vmatpush1.bf16.msra.mxu0 0
        %1373 = vmatprep.subr.bf16.mxu0 0
        %1374 = vmatpush1.bf16.msra.mxu0 0
        %1375 = vmatprep.subr.bf16.mxu0 0
        %1376 = vmatpush1.bf16.msra.mxu0 0
        %1377 = vmatprep.subr.bf16.mxu0 0
        %1378 = vmatpush1.bf16.msra.mxu0 0
        %1379 = vmatprep.subr.bf16.mxu0 0
        %1380 = vmatpush1.bf16.msra.mxu0 0
        %1381 = vmatprep.mubr.bf16.mxu0 0
        %1382 = vmatmul.mubr.bf16.gmra.mrb[0].mxu0 %v1344
        %v1383 = vpop.f32.mrb[0].mxu0
        %v1384 = vadd.f32 0.0, %v1383
        %v1385 = vpop.f32.mrb[0].mxu0
        %v1386 = vpop.f32.mrb[0].mxu0
        %v1387 = vpop.f32.mrb[0].mxu0
        %1388 = vdwg.mxu0
        %v1389 = vpack.c.bf16 %v1384, %v1384
        %v1391 = vunpack.c.l.b16 %v1389
        %v1392 = vpack.c.b16 %v1391, %v1391
        %1393 = vrot.lane.b32.xlu0 %v1392, 8
        %v1394 = vpop.permute.xlu0 %1393
        %vm1396 = vcmask 126016
        %1397 = vst.msk [vmem:[#allocation3] sm:$0xf] %vm1396, %v1394
        %1398 = vrot.lane.b32.xlu0 %v1157, 112
        %v1399 = vpop.permute.xlu0 %1398
        %1400 = vrot.lane.b32.xlu0 %v1157, 80
        %v1401 = vpop.permute.xlu0 %1400
        %v1403 = vsel %vm1168, %v1399, 0
        %v1406 = vsel %vm1168, %v1401, 0
        %1408 = vmatprep.subr.bf16.mxu0 0
        %1409 = vmatpush1.bf16.xpose.msra.mxu0 %v1406
        %1410 = vmatprep.subr.bf16.mxu0 0
        %1411 = vmatpush1.bf16.xpose.msra.mxu0 0
        %1412 = vmatprep.subr.bf16.mxu0 0
        %1413 = vmatpush1.bf16.xpose.msra.mxu0 0
        %1414 = vmatprep.subr.bf16.mxu0 0
        %1415 = vmatpush1.bf16.xpose.msra.mxu0 0
        %1416 = vmatprep.subr.bf16.mxu0 0
        %1417 = vmatpush1.bf16.xpose.msra.mxu0 0
        %1418 = vmatprep.subr.bf16.mxu0 0
        %1419 = vmatpush1.bf16.xpose.msra.mxu0 0
        %1420 = vmatprep.subr.bf16.mxu0 0
        %1421 = vmatpush1.bf16.xpose.msra.mxu0 0
        %1422 = vmatprep.subr.bf16.mxu0 0
        %1423 = vmatpush1.bf16.xpose.msra.mxu0 0
        %1424 = vmatprep.subr.bf16.mxu0 0
        %1425 = vmatpush1.bf16.xpose.msra.mxu0 0
        %1426 = vmatprep.subr.bf16.mxu0 0
        %1427 = vmatpush1.bf16.xpose.msra.mxu0 0
        %1428 = vmatprep.subr.bf16.mxu0 0
        %1429 = vmatpush1.bf16.xpose.msra.mxu0 0
        %1430 = vmatprep.subr.bf16.mxu0 0
        %1431 = vmatpush1.bf16.xpose.msra.mxu0 0
        %1432 = vmatprep.subr.bf16.mxu0 0
        %1433 = vmatpush1.bf16.xpose.msra.mxu0 0
        %1434 = vmatprep.subr.bf16.mxu0 0
        %1435 = vmatpush1.bf16.xpose.msra.mxu0 0
        %1436 = vmatprep.subr.bf16.mxu0 0
        %1437 = vmatpush1.bf16.xpose.msra.mxu0 0
        %1438 = vmatprep.subr.bf16.mxu0 0
        %1439 = vmatpush1.bf16.xpose.msra.mxu0 0
        %1440 = vmatprep.mubr.bf16.mxu0 0
        %1441 = vmatmul.mubr.bf16.gmra.mrb[0].mxu0 %v1403
        %v1442 = vpop.f32.mrb[0].mxu0
        %v1443 = vadd.f32 %v1163, %v1442
        %v1444 = vpop.f32.mrb[0].mxu0
        %v1445 = vpop.f32.mrb[0].mxu0
        %v1446 = vpop.f32.mrb[0].mxu0
        %1447 = vdwg.mxu0
        %v1448 = vsel %vm1168, %v1443, -inf
        %1449 = vmax.xlane.f32.xlu0 %v1448
        %v1450 = vpop.xlane.xlu0 %1449
        %v1451 = vsub.f32 %v1443, %v1450
        %v1452 = vmul.f32 %v1451, 1.442695
        %v1453 = vpow.pop %v1452
        %v1454 = vsel %vm1168, %v1453, 0.0
        %1455 = vadd.xlane.f32.xlu0 %v1454
        %v1456 = vpop.xlane.xlu0 %1455
        %v1457 = vrcp.pop %v1456
        %v1458 = vmul.f32 %v1453, %v1457
        %v1459 = vpack.c.bf16 %v1458, %v1458
        %1460 = vrot.lane.b32.xlu0 %v1157, 48
        %v1461 = vpop.permute.xlu0 %1460
        %v1463 = vsel %vm1168, %v1459, 0
        %v1466 = vsel %vm1232, %v1461, 0
        %1468 = vmatprep.subr.bf16.mxu0 0
        %1469 = vmatpush1.bf16.msra.mxu0 %v1466
        %1470 = vmatprep.subr.bf16.mxu0 0
        %1471 = vmatpush1.bf16.msra.mxu0 0
        %1472 = vmatprep.subr.bf16.mxu0 0
        %1473 = vmatpush1.bf16.msra.mxu0 0
        %1474 = vmatprep.subr.bf16.mxu0 0
        %1475 = vmatpush1.bf16.msra.mxu0 0
        %1476 = vmatprep.subr.bf16.mxu0 0
        %1477 = vmatpush1.bf16.msra.mxu0 0
        %1478 = vmatprep.subr.bf16.mxu0 0
        %1479 = vmatpush1.bf16.msra.mxu0 0
        %1480 = vmatprep.subr.bf16.mxu0 0
        %1481 = vmatpush1.bf16.msra.mxu0 0
        %1482 = vmatprep.subr.bf16.mxu0 0
        %1483 = vmatpush1.bf16.msra.mxu0 0
        %1484 = vmatprep.subr.bf16.mxu0 0
        %1485 = vmatpush1.bf16.msra.mxu0 0
        %1486 = vmatprep.subr.bf16.mxu0 0
        %1487 = vmatpush1.bf16.msra.mxu0 0
        %1488 = vmatprep.subr.bf16.mxu0 0
        %1489 = vmatpush1.bf16.msra.mxu0 0
        %1490 = vmatprep.subr.bf16.mxu0 0
        %1491 = vmatpush1.bf16.msra.mxu0 0
        %1492 = vmatprep.subr.bf16.mxu0 0
        %1493 = vmatpush1.bf16.msra.mxu0 0
        %1494 = vmatprep.subr.bf16.mxu0 0
        %1495 = vmatpush1.bf16.msra.mxu0 0
        %1496 = vmatprep.subr.bf16.mxu0 0
        %1497 = vmatpush1.bf16.msra.mxu0 0
        %1498 = vmatprep.subr.bf16.mxu0 0
        %1499 = vmatpush1.bf16.msra.mxu0 0
        %1500 = vmatprep.mubr.bf16.mxu0 0
        %1501 = vmatmul.mubr.bf16.gmra.mrb[0].mxu0 %v1463
        %v1502 = vpop.f32.mrb[0].mxu0
        %v1503 = vadd.f32 0.0, %v1502
        %v1504 = vpop.f32.mrb[0].mxu0
        %v1505 = vpop.f32.mrb[0].mxu0
        %v1506 = vpop.f32.mrb[0].mxu0
        %1507 = vdwg.mxu0
        %v1508 = vpack.c.bf16 %v1503, %v1503
        %v1510 = vunpack.c.l.b16 %v1508
        %v1511 = vpack.c.b16 %v1510, %v1510
        %1512 = vrot.lane.b32.xlu0 %v1511, 16
        %v1513 = vpop.permute.xlu0 %1512
        %vm1515 = vcmask 191616
        %1516 = vst.msk [vmem:[#allocation3] sm:$0xf] %vm1515, %v1513
        %1517 = vrot.lane.b32.xlu0 %v1157, 104
        %v1518 = vpop.permute.xlu0 %1517
        %1519 = vrot.lane.b32.xlu0 %v1157, 72
        %v1520 = vpop.permute.xlu0 %1519
        %v1522 = vsel %vm1168, %v1518, 0
        %v1525 = vsel %vm1168, %v1520, 0
        %1527 = vmatprep.subr.bf16.mxu0 0
        %1528 = vmatpush1.bf16.xpose.msra.mxu0 %v1525
        %1529 = vmatprep.subr.bf16.mxu0 0
        %1530 = vmatpush1.bf16.xpose.msra.mxu0 0
        %1531 = vmatprep.subr.bf16.mxu0 0
        %1532 = vmatpush1.bf16.xpose.msra.mxu0 0
        %1533 = vmatprep.subr.bf16.mxu0 0
        %1534 = vmatpush1.bf16.xpose.msra.mxu0 0
        %1535 = vmatprep.subr.bf16.mxu0 0
        %1536 = vmatpush1.bf16.xpose.msra.mxu0 0
        %1537 = vmatprep.subr.bf16.mxu0 0
        %1538 = vmatpush1.bf16.xpose.msra.mxu0 0
        %1539 = vmatprep.subr.bf16.mxu0 0
        %1540 = vmatpush1.bf16.xpose.msra.mxu0 0
        %1541 = vmatprep.subr.bf16.mxu0 0
        %1542 = vmatpush1.bf16.xpose.msra.mxu0 0
        %1543 = vmatprep.subr.bf16.mxu0 0
        %1544 = vmatpush1.bf16.xpose.msra.mxu0 0
        %1545 = vmatprep.subr.bf16.mxu0 0
        %1546 = vmatpush1.bf16.xpose.msra.mxu0 0
        %1547 = vmatprep.subr.bf16.mxu0 0
        %1548 = vmatpush1.bf16.xpose.msra.mxu0 0
        %1549 = vmatprep.subr.bf16.mxu0 0
        %1550 = vmatpush1.bf16.xpose.msra.mxu0 0
        %1551 = vmatprep.subr.bf16.mxu0 0
        %1552 = vmatpush1.bf16.xpose.msra.mxu0 0
        %1553 = vmatprep.subr.bf16.mxu0 0
        %1554 = vmatpush1.bf16.xpose.msra.mxu0 0
        %1555 = vmatprep.subr.bf16.mxu0 0
        %1556 = vmatpush1.bf16.xpose.msra.mxu0 0
        %1557 = vmatprep.subr.bf16.mxu0 0
        %1558 = vmatpush1.bf16.xpose.msra.mxu0 0
        %1559 = vmatprep.mubr.bf16.mxu0 0
        %1560 = vmatmul.mubr.bf16.gmra.mrb[0].mxu0 %v1522
        %v1561 = vpop.f32.mrb[0].mxu0
        %v1562 = vadd.f32 %v1163, %v1561
        %v1563 = vpop.f32.mrb[0].mxu0
        %v1564 = vpop.f32.mrb[0].mxu0
        %v1565 = vpop.f32.mrb[0].mxu0
        %1566 = vdwg.mxu0
        %v1567 = vsel %vm1168, %v1562, -inf
        %1568 = vmax.xlane.f32.xlu0 %v1567
        %v1569 = vpop.xlane.xlu0 %1568
        %v1570 = vsub.f32 %v1562, %v1569
        %v1571 = vmul.f32 %v1570, 1.442695
        %v1572 = vpow.pop %v1571
        %v1573 = vsel %vm1168, %v1572, 0.0
        %1574 = vadd.xlane.f32.xlu0 %v1573
        %v1575 = vpop.xlane.xlu0 %1574
        %v1576 = vrcp.pop %v1575
        %v1577 = vmul.f32 %v1572, %v1576
        %v1578 = vpack.c.bf16 %v1577, %v1577
        %1579 = vrot.lane.b32.xlu0 %v1157, 40
        %v1580 = vpop.permute.xlu0 %1579
        %v1582 = vsel %vm1168, %v1578, 0
        %v1585 = vsel %vm1232, %v1580, 0
        %1587 = vmatprep.subr.bf16.mxu0 0
        %1588 = vmatpush1.bf16.msra.mxu0 %v1585
        %1589 = vmatprep.subr.bf16.mxu0 0
        %1590 = vmatpush1.bf16.msra.mxu0 0
        %1591 = vmatprep.subr.bf16.mxu0 0
        %1592 = vmatpush1.bf16.msra.mxu0 0
        %1593 = vmatprep.subr.bf16.mxu0 0
        %1594 = vmatpush1.bf16.msra.mxu0 0
        %1595 = vmatprep.subr.bf16.mxu0 0
        %1596 = vmatpush1.bf16.msra.mxu0 0
        %1597 = vmatprep.subr.bf16.mxu0 0
        %1598 = vmatpush1.bf16.msra.mxu0 0
        %1599 = vmatprep.subr.bf16.mxu0 0
        %1600 = vmatpush1.bf16.msra.mxu0 0
        %1601 = vmatprep.subr.bf16.mxu0 0
        %1602 = vmatpush1.bf16.msra.mxu0 0
        %1603 = vmatprep.subr.bf16.mxu0 0
        %1604 = vmatpush1.bf16.msra.mxu0 0
        %1605 = vmatprep.subr.bf16.mxu0 0
        %1606 = vmatpush1.bf16.msra.mxu0 0
        %1607 = vmatprep.subr.bf16.mxu0 0
        %1608 = vmatpush1.bf16.msra.mxu0 0
        %1609 = vmatprep.subr.bf16.mxu0 0
        %1610 = vmatpush1.bf16.msra.mxu0 0
        %1611 = vmatprep.subr.bf16.mxu0 0
        %1612 = vmatpush1.bf16.msra.mxu0 0
        %1613 = vmatprep.subr.bf16.mxu0 0
        %1614 = vmatpush1.bf16.msra.mxu0 0
        %1615 = vmatprep.subr.bf16.mxu0 0
        %1616 = vmatpush1.bf16.msra.mxu0 0
        %1617 = vmatprep.subr.bf16.mxu0 0
        %1618 = vmatpush1.bf16.msra.mxu0 0
        %1619 = vmatprep.mubr.bf16.mxu0 0
        %1620 = vmatmul.mubr.bf16.gmra.mrb[0].mxu0 %v1582
        %v1621 = vpop.f32.mrb[0].mxu0
        %v1622 = vadd.f32 0.0, %v1621
        %v1623 = vpop.f32.mrb[0].mxu0
        %v1624 = vpop.f32.mrb[0].mxu0
        %v1625 = vpop.f32.mrb[0].mxu0
        %1626 = vdwg.mxu0
        %v1627 = vpack.c.bf16 %v1622, %v1622
        %v1629 = vunpack.c.l.b16 %v1627
        %v1630 = vpack.c.b16 %v1629, %v1629
        %1631 = vrot.lane.b32.xlu0 %v1630, 24
        %v1632 = vpop.permute.xlu0 %1631
        %vm1634 = vcmask 257216
        %1635 = vst.msk [vmem:[#allocation3] sm:$0xf] %vm1634, %v1632
        %v1636 = vld [vmem:[#allocation3] sm:$0xf]
        %v1637 = vld [vmem:[%s862] sm:$0xf]
        %v1638 = vld [vmem:[%s862 + $0x4] sm:$0xf]
        %v1639 = vld [vmem:[%s862 + $0x8] sm:$0xf]
        %v1640 = vld [vmem:[%s862 + $0xc] sm:$0xf]
        %v1641 = vld [vmem:[%s870] sm:$0x1]
        %v1643 = vlaneseq
        %v1644 = vshrl.u32 %v1643, 7
        %v1645 = vsub.s32 0, %v1644
        %v1646 = vrot.slane %v1641, %v1645
        %v1652 = vunpack.c.l.b16 %v1637
        %v1653 = vunpack.c.l.b16 %v1638
        %v1654 = vunpack.c.l.b16 %v1639
        %v1655 = vunpack.c.l.b16 %v1640
        %v1656 = vpack.c.b16 %v1653, %v1652
        %v1657 = vpack.c.b16 %v1655, %v1654
        %v1661 = vsel %vm1113, %v1636, 0
        %1663 = vmatprep.subr.bf16.mxu0 0
        %1664 = vmatpush1.bf16.msra.mxu0 %v1656
        %1665 = vmatprep.subr.bf16.mxu0 0
        %1666 = vmatpush1.bf16.msra.mxu0 %v1657
        %1667 = vmatprep.subr.bf16.mxu0 0
        %1668 = vmatpush1.bf16.msra.mxu0 0
        %1669 = vmatprep.subr.bf16.mxu0 0
        %1670 = vmatpush1.bf16.msra.mxu0 0
        %1671 = vmatprep.subr.bf16.mxu0 0
        %1672 = vmatpush1.bf16.msra.mxu0 0
        %1673 = vmatprep.subr.bf16.mxu0 0
        %1674 = vmatpush1.bf16.msra.mxu0 0
        %1675 = vmatprep.subr.bf16.mxu0 0
        %1676 = vmatpush1.bf16.msra.mxu0 0
        %1677 = vmatprep.subr.bf16.mxu0 0
        %1678 = vmatpush1.bf16.msra.mxu0 0
        %1679 = vmatprep.subr.bf16.mxu0 0
        %1680 = vmatpush1.bf16.msra.mxu0 0
        %1681 = vmatprep.subr.bf16.mxu0 0
        %1682 = vmatpush1.bf16.msra.mxu0 0
        %1683 = vmatprep.subr.bf16.mxu0 0
        %1684 = vmatpush1.bf16.msra.mxu0 0
        %1685 = vmatprep.subr.bf16.mxu0 0
        %1686 = vmatpush1.bf16.msra.mxu0 0
        %1687 = vmatprep.subr.bf16.mxu0 0
        %1688 = vmatpush1.bf16.msra.mxu0 0
        %1689 = vmatprep.subr.bf16.mxu0 0
        %1690 = vmatpush1.bf16.msra.mxu0 0
        %1691 = vmatprep.subr.bf16.mxu0 0
        %1692 = vmatpush1.bf16.msra.mxu0 0
        %1693 = vmatprep.subr.bf16.mxu0 0
        %1694 = vmatpush1.bf16.msra.mxu0 0
        %1695 = vmatprep.mubr.bf16.mxu0 0
        %1696 = vmatmul.mubr.bf16.gmra.mrb[0].mxu0 %v1661
        %v1697 = vpop.f32.mrb[0].mxu0
        %v1698 = vadd.f32 %v1646, %v1697
        %v1699 = vpop.f32.mrb[0].mxu0
        %v1700 = vpop.f32.mrb[0].mxu0
        %v1701 = vpop.f32.mrb[0].mxu0
        %1702 = vdwg.mxu0
        %v1703 = vunpack.c.l.bf16 %v1089
        %v1704 = vadd.f32 %v1698, %v1703
        %v1705 = vld [vmem:[%s878] sm:$0x1]
        %v1706 = vld [vmem:[%s886] sm:$0x1]
        %v1707 = vsel %vm1113, %v1704, 0.0
        %1708 = vadd.xlane.f32.xlu0 %v1707
        %v1709 = vpop.xlane.xlu0 %1708
        %v1710 = vrcp.pop 32.0
        %v1711 = vmul.f32 %v1709, %v1710
        %v1712 = vsub.f32 %v1704, %v1711
        %v1713 = vmul.f32 %v1712, %v1712
        %v1714 = vsel %vm1113, %v1713, 0.0
        %1715 = vadd.xlane.f32.xlu0 %v1714
        %v1716 = vpop.xlane.xlu0 %1715
        %v1717 = vmul.f32 %v1716, %v1710
        %v1718 = vadd.f32 %v1717, 1e-12
        %v1719 = vrsqrt.pop %v1718
        %v1720 = vmul.f32 %v1712, %v1719
        %v1722 = vlaneseq
        %v1723 = vshrl.u32 %v1722, 7
        %v1724 = vsub.s32 0, %v1723
        %v1725 = vrot.slane %v1705, %v1724
        %v1727 = vmul.f32 %v1720, %v1725
        %v1729 = vlaneseq
        %v1730 = vshrl.u32 %v1729, 7
        %v1731 = vsub.s32 0, %v1730
        %v1732 = vrot.slane %v1706, %v1731
        %v1734 = vadd.f32 %v1727, %v1732
        %v1735 = vpack.c.bf16 %v1734, %v1734
        %v1736 = vld [vmem:[%s895] sm:$0xf]
        %v1737 = vld [vmem:[%s895 + $0x4] sm:$0xf]
        %v1738 = vld [vmem:[%s895 + $0x8] sm:$0xf]
        %v1739 = vld [vmem:[%s895 + $0xc] sm:$0xf]
        %v1740 = vld [vmem:[%s903] sm:$0x1]
        %v1742 = vlaneseq
        %v1743 = vshrl.u32 %v1742, 7
        %v1744 = vsub.s32 0, %v1743
        %v1745 = vrot.slane %v1740, %v1744
        %v1751 = vunpack.c.l.b16 %v1736
        %v1752 = vunpack.c.l.b16 %v1737
        %v1753 = vunpack.c.l.b16 %v1738
        %v1754 = vunpack.c.l.b16 %v1739
        %v1755 = vpack.c.b16 %v1752, %v1751
        %v1756 = vpack.c.b16 %v1754, %v1753
        %v1760 = vsel %vm1113, %v1735, 0
        %1762 = vmatprep.subr.bf16.mxu0 0
        %1763 = vmatpush1.bf16.msra.mxu0 %v1755
        %1764 = vmatprep.subr.bf16.mxu0 0
        %1765 = vmatpush1.bf16.msra.mxu0 %v1756
        %1766 = vmatprep.subr.bf16.mxu0 0
        %1767 = vmatpush1.bf16.msra.mxu0 0
        %1768 = vmatprep.subr.bf16.mxu0 0
        %1769 = vmatpush1.bf16.msra.mxu0 0
        %1770 = vmatprep.subr.bf16.mxu0 0
        %1771 = vmatpush1.bf16.msra.mxu0 0
        %1772 = vmatprep.subr.bf16.mxu0 0
        %1773 = vmatpush1.bf16.msra.mxu0 0
        %1774 = vmatprep.subr.bf16.mxu0 0
        %1775 = vmatpush1.bf16.msra.mxu0 0
        %1776 = vmatprep.subr.bf16.mxu0 0
        %1777 = vmatpush1.bf16.msra.mxu0 0
        %1778 = vmatprep.subr.bf16.mxu0 0
        %1779 = vmatpush1.bf16.msra.mxu0 0
        %1780 = vmatprep.subr.bf16.mxu0 0
        %1781 = vmatpush1.bf16.msra.mxu0 0
        %1782 = vmatprep.subr.bf16.mxu0 0
        %1783 = vmatpush1.bf16.msra.mxu0 0
        %1784 = vmatprep.subr.bf16.mxu0 0
        %1785 = vmatpush1.bf16.msra.mxu0 0
        %1786 = vmatprep.subr.bf16.mxu0 0
        %1787 = vmatpush1.bf16.msra.mxu0 0
        %1788 = vmatprep.subr.bf16.mxu0 0
        %1789 = vmatpush1.bf16.msra.mxu0 0
        %1790 = vmatprep.subr.bf16.mxu0 0
        %1791 = vmatpush1.bf16.msra.mxu0 0
        %1792 = vmatprep.subr.bf16.mxu0 0
        %1793 = vmatpush1.bf16.msra.mxu0 0
        %1794 = vmatprep.mubr.bf16.mxu0 0
        %1795 = vmatmul.mubr.bf16.gmra.mrb[0].mxu0 %v1760
        %v1796 = vpop.f32.mrb[0].mxu0
        %v1797 = vadd.f32 %v1745, %v1796
        %v1798 = vpop.f32.mrb[0].mxu0
        %v1799 = vpop.f32.mrb[0].mxu0
        %v1800 = vpop.f32.mrb[0].mxu0
        %1801 = vdwg.mxu0
        %v1802 = vmul.f32 %v1797, 0.5
        %v1803 = vmul.f32 %v1797, %v1797
        %v1804 = vmul.f32 %v1797, %v1803
        %v1805 = vmul.f32 %v1804, 0.044715
        %v1806 = vadd.f32 %v1797, %v1805
        %v1807 = vmul.f32 %v1806, 0.7978846
        %v1808 = vtanh.pop %v1807
        %v1809 = vadd.f32 %v1808, 1.0
        %v1810 = vmul.f32 %v1802, %v1809
        %v1811 = vpack.c.bf16 %v1810, %v1810
        %v1812 = vld [vmem:[%s912] sm:$0xf]
        %v1813 = vld [vmem:[%s912 + $0x4] sm:$0xf]
        %v1814 = vld [vmem:[%s912 + $0x8] sm:$0xf]
        %v1815 = vld [vmem:[%s912 + $0xc] sm:$0xf]
        %v1816 = vld [vmem:[%s912 + $0x10] sm:$0xf]
        %v1817 = vld [vmem:[%s912 + $0x14] sm:$0xf]
        %v1818 = vld [vmem:[%s912 + $0x18] sm:$0xf]
        %v1819 = vld [vmem:[%s912 + $0x1c] sm:$0xf]
        %v1820 = vld [vmem:[%s920] sm:$0x1]
        %v1822 = vlaneseq
        %v1823 = vshrl.u32 %v1822, 7
        %v1824 = vsub.s32 0, %v1823
        %v1825 = vrot.slane %v1820, %v1824
        %v1835 = vunpack.c.l.b16 %v1812
        %v1836 = vunpack.c.l.b16 %v1813
        %v1837 = vunpack.c.l.b16 %v1814
        %v1838 = vunpack.c.l.b16 %v1815
        %v1839 = vunpack.c.l.b16 %v1816
        %v1840 = vunpack.c.l.b16 %v1817
        %v1841 = vunpack.c.l.b16 %v1818
        %v1842 = vunpack.c.l.b16 %v1819
        %v1843 = vpack.c.b16 %v1836, %v1835
        %v1844 = vpack.c.b16 %v1838, %v1837
        %v1845 = vpack.c.b16 %v1840, %v1839
        %v1846 = vpack.c.b16 %v1842, %v1841
        %vm1851 = vcmask 523264
        %v1853 = vsel %vm1851, %v1811, 0
        %1855 = vmatprep.subr.bf16.mxu0 0
        %1856 = vmatpush1.bf16.msra.mxu0 %v1843
        %1857 = vmatprep.subr.bf16.mxu0 0
        %1858 = vmatpush1.bf16.msra.mxu0 %v1844
        %1859 = vmatprep.subr.bf16.mxu0 0
        %1860 = vmatpush1.bf16.msra.mxu0 %v1845
        %1861 = vmatprep.subr.bf16.mxu0 0
        %1862 = vmatpush1.bf16.msra.mxu0 %v1846
        %1863 = vmatprep.subr.bf16.mxu0 0
        %1864 = vmatpush1.bf16.msra.mxu0 0
        %1865 = vmatprep.subr.bf16.mxu0 0
        %1866 = vmatpush1.bf16.msra.mxu0 0
        %1867 = vmatprep.subr.bf16.mxu0 0
        %1868 = vmatpush1.bf16.msra.mxu0 0
        %1869 = vmatprep.subr.bf16.mxu0 0
        %1870 = vmatpush1.bf16.msra.mxu0 0
        %1871 = vmatprep.subr.bf16.mxu0 0
        %1872 = vmatpush1.bf16.msra.mxu0 0
        %1873 = vmatprep.subr.bf16.mxu0 0
        %1874 = vmatpush1.bf16.msra.mxu0 0
        %1875 = vmatprep.subr.bf16.mxu0 0
        %1876 = vmatpush1.bf16.msra.mxu0 0
        %1877 = vmatprep.subr.bf16.mxu0 0
        %1878 = vmatpush1.bf16.msra.mxu0 0
        %1879 = vmatprep.subr.bf16.mxu0 0
        %1880 = vmatpush1.bf16.msra.mxu0 0
        %1881 = vmatprep.subr.bf16.mxu0 0
        %1882 = vmatpush1.bf16.msra.mxu0 0
        %1883 = vmatprep.subr.bf16.mxu0 0
        %1884 = vmatpush1.bf16.msra.mxu0 0
        %1885 = vmatprep.subr.bf16.mxu0 0
        %1886 = vmatpush1.bf16.msra.mxu0 0
        %1887 = vmatprep.mubr.bf16.mxu0 0
        %1888 = vmatmul.mubr.bf16.gmra.mrb[0].mxu0 %v1853
        %v1889 = vpop.f32.mrb[0].mxu0
        %v1890 = vadd.f32 %v1825, %v1889
        %v1891 = vpop.f32.mrb[0].mxu0
        %v1892 = vpop.f32.mrb[0].mxu0
        %v1893 = vpop.f32.mrb[0].mxu0
        %1894 = vdwg.mxu0
        %v1895 = vadd.f32 %v1890, %v1734
        %v1896 = vld [vmem:[%s928] sm:$0x1]
        %v1897 = vld [vmem:[%s936] sm:$0x1]
        %v1898 = vsel %vm1113, %v1895, 0.0
        %1899 = vadd.xlane.f32.xlu0 %v1898
        %v1900 = vpop.xlane.xlu0 %1899
        %v1901 = vmul.f32 %v1900, %v1710
        %v1902 = vsub.f32 %v1895, %v1901
        %v1903 = vmul.f32 %v1902, %v1902
        %v1904 = vsel %vm1113, %v1903, 0.0
        %1905 = vadd.xlane.f32.xlu0 %v1904
        %v1906 = vpop.xlane.xlu0 %1905
        %v1907 = vmul.f32 %v1906, %v1710
        %v1908 = vadd.f32 %v1907, 1e-12
        %v1909 = vrsqrt.pop %v1908
        %v1910 = vmul.f32 %v1902, %v1909
        %v1912 = vlaneseq
        %v1913 = vshrl.u32 %v1912, 7
        %v1914 = vsub.s32 0, %v1913
        %v1915 = vrot.slane %v1896, %v1914
        %v1917 = vmul.f32 %v1910, %v1915
        %v1919 = vlaneseq
        %v1920 = vshrl.u32 %v1919, 7
        %v1921 = vsub.s32 0, %v1920
        %v1922 = vrot.slane %v1897, %v1921
        %v1924 = vadd.f32 %v1917, %v1922
        %v1925 = vpack.c.bf16 %v1924, %v1924
        %vm1926 = vcmask 257024
        %1927 = vst.msk [vmem:[%s1088] sm:$0xf] %vm1926, %v1925
        %1928 = vst.msk [vmem:[%s1042] sm:$0xf] %vm1926, %v1925
        %s1929 = sand.u32 %s485, 1
        %s1930 = scalar_lea.sflag [#allocation6], %s1929
        %s1931 = sand.u32 %s485, 1
        %s1932 = smul.addr %s1931, 4
        %s1933 = scalar_lea.vmem [#allocation25], %s1932
        // Predicated region
        $region161: #{tpu_custom_call.1} parent=87 // pred_check
          %p1934 = pneg %p495
        $region162: #{tpu_custom_call.1} parent=87 // pred_check_branch
          %1936 = sbr.rel (%p1934) target = $region164
        $region163: #{tpu_custom_call.1} parent=87 // pred_region
          %s1938 = ssub.s32 64, 64
          %1939 = vsyncadd %s1930, %s1938
          %s1940 = smul.addr %s40, 2
          %s1941 = sadd.s32 %s41, %s1940
          %s1942 = smul.addr %s1941, 64
          %s1943 = scalar_lea.hbm %s17, %s1942
          %s1945 = sshll.u32 %s1933, 4
          %s1946 = int_to_ptr.vmem [resolvable:$true] %s1945
          %1948 = dma.vmem_to_hbm [thread:$0]  %s1946, 64, %s1943, %s1930
        $region164: #{tpu_custom_call.1} parent=87 // pred_fallthru
          _
      $region88: #{tpu_custom_call.1} parent=5 // pred_fallthru
        _
      %p1949 = scmp.le.s32.totalorder 2, %s31
      // Predicated region
      $region165: #{tpu_custom_call.1} parent=5 // pred_check
        %p1950 = pneg %p1949
      $region166: #{tpu_custom_call.1} parent=5 // pred_check_branch
        %1952 = sbr.rel (%p1950) target = $region168
      $region167: #{tpu_custom_call.1} parent=5 // pred_region
        %s1953 = ssub.s32 %s31, 2
        // Predicated region
        $region169: #{tpu_custom_call.1} parent=167 // pred_check
          %p1954 = pneg %p501
        $region170: #{tpu_custom_call.1} parent=167 // pred_check_branch
          %1956 = sbr.rel (%p1954) target = $region172
        $region171: #{tpu_custom_call.1} parent=167 // pred_region
          %s1957 = sand.u32 %s486, 1
          %s1958 = scalar_lea.sflag [#allocation6], %s1957
          %s1959 = sand.u32 %s486, 1
          %s1960 = smul.addr %s1959, 4
          %s1961 = scalar_lea.vmem [#allocation25], %s1960
          %1962 = dma.done %s1958, 64
        $region172: #{tpu_custom_call.1} parent=167 // pred_fallthru
          _
      $region168: #{tpu_custom_call.1} parent=5 // pred_fallthru
        _
    $region6: #{tpu_custom_call.1} parent=1 // loop_footer
      %s35 = sadd.s32 1, %s31
    $region7: #{tpu_custom_call.1} parent=1 // loop_footer_branch
      %30 = sbr.rel target = $region3
    $region8: #{tpu_custom_call.1} parent=1 // loop_exit
      _
    %1963 = vsyncpa [#allocation5], 1
    %s1964 = scalar_lea.sflag [#allocation5], 1
    %1965 = vsyncpa %s1964, 1
    %1966 = vsyncpa [#allocation8], 1
    %1967 = vsyncpa [#allocation11], 1
    %1968 = vsyncpa [#allocation6], 1
    %s1969 = scalar_lea.sflag [#allocation6], 1
    %1970 = vsyncpa %s1969, 1

</llo_original>
